<compile_context>
chip_gen: v7x
topology: tpu7x:2x2x1
jax: 0.10.0
libtpu: 0.0.40
codegen_flags: <defaults>
</compile_context>

<pallas_src>
import functools

import numpy as np
import jax
import jax.numpy as jnp
from jax.experimental import pallas as pl
from jax.experimental.pallas import tpu as pltpu


# --------------------------------------------------------------------------
# small helpers
# --------------------------------------------------------------------------

_MIB = 1024 * 1024
_CFG = None


def _round_up(x, m):
    return ((x + m - 1) // m) * m


def _cdiv(a, b):
    return -(-a // b)


def _vmem_config():
    """Generation-aware VMEM budget / limit / pipelining preferences."""
    global _CFG
    if _CFG is not None:
        return _CFG
    vmem = None
    try:
        vmem = int(pltpu.get_tpu_info().vmem_capacity_bytes)
    except Exception:
        vmem = None
    if vmem is not None and vmem >= 100 * _MIB:
        # v5e / v6e / v5p: 128 MiB physical VMEM -> big lane tiles.
        cfg = dict(budget=56 * _MIB, limit=96 * _MIB, min_steps=2, tp_max=4096)
    elif vmem is not None:
        # v7x: 64 MiB per TensorCore, 2 cores -> keep >= 4 grid steps.
        limit = min(32 * _MIB, max(8 * _MIB, vmem - 8 * _MIB))
        cfg = dict(budget=min(24 * _MIB, (limit * 3) // 4), limit=limit,
                   min_steps=4, tp_max=2048)
    else:
        # Unknown chip: conservative (same settings the previous version used).
        cfg = dict(budget=20 * _MIB, limit=32 * _MIB, min_steps=2, tp_max=2048)
    _CFG = cfg
    return cfg


def _pick_tile_1x1(p, k, n, kd, has_res, out_bytes, cfg):
    """Largest lane tile (power-of-two multiple of 128) whose double-buffered
    working set fits the budget while keeping >= min_steps grid steps."""
    resident = 2 * n * k + 2 * n * kd + 4 * n + 64 * 1024
    per_lane = 2 * (2 * k + 2 * kd + (2 * n if has_res else 0) + out_bytes * n)
    per_lane += 8 * n  # f32 epilogue temporaries

    def fits(t):
        return resident + per_lane * t <= cfg['budget']

    tp = 128
    while (tp * 2 <= cfg['tp_max'] and fits(tp * 2)
           and _cdiv(p, tp * 2) >= cfg['min_steps']):
        tp *= 2
    return tp


def _pick_tile_3x3(pf, cin, n, f, out_bytes, cfg):
    """Lane tile for the tap-accumulation conv; multiple of 2*f (halo block)."""
    resident = 2 * n * 9 * cin + 4 * n + 2 * (2 * cin * 2 * f) + 64 * 1024
    per_lane = 2 * (2 * cin + out_bytes * n) + 2 * cin + 2 * cin + 8 * n

    def fits(t):
        return resident + per_lane * t <= cfg['budget']

    tp = 2 * f
    while (tp * 2 <= cfg['tp_max'] and fits(tp * 2)
           and _cdiv(pf, tp * 2) >= cfg['min_steps']):
        tp *= 2
    return tp


# --------------------------------------------------------------------------
# Pallas kernels.  Activations are channels-first with pixels flattened on
# the LANE axis: (C, P).  bf16 operands on the MXU, f32 accumulation.
# --------------------------------------------------------------------------

def _epilogue(y, slope, out_dtype):
    if slope != 1.0:                      # slope == 1.0 -> identity, skip VPU ops
        y = jnp.maximum(y, slope * y)     # valid for 0 < slope < 1
    return y.astype(out_dtype)


def _mm_kernel(w_ref, x_ref, b_ref, o_ref, *, slope):
    y = jnp.dot(w_ref[...], x_ref[...], preferred_element_type=jnp.float32)
    y = y + b_ref[...]
    o_ref[...] = _epilogue(y, slope, o_ref.dtype)


def _mm_res_kernel(w_ref, x_ref, b_ref, r_ref, o_ref, *, slope):
    y = jnp.dot(w_ref[...], x_ref[...], preferred_element_type=jnp.float32)
    y = y + b_ref[...] + r_ref[...].astype(jnp.float32)
    o_ref[...] = _epilogue(y, slope, o_ref.dtype)


def _mm_ds_kernel(w_ref, x_ref, wd_ref, xd_ref, b_ref, o_ref, *, slope):
    # conv3 GEMM + fused downsample(1x1) GEMM on the strided input, one epilogue.
    y = jnp.dot(w_ref[...], x_ref[...], preferred_element_type=jnp.float32)
    y = y + jnp.dot(wd_ref[...], xd_ref[...], preferred_element_type=jnp.float32)
    y = y + b_ref[...]
    o_ref[...] = _epilogue(y, slope, o_ref.dtype)


def _conv3x3_kernel(w_ref, xm_ref, xt_ref, b_ref, o_ref, xw_ref,
                    *, slope, cin, wp, f):
    """In-kernel 3x3 tap accumulation.

    xm_ref: (cin, tp)   main pixel window (halo-shifted flat layout)
    xt_ref: (cin, 2f)   tail halo window (the next 2f flat pixels)
    w_ref:  (cout, 9*cin) folded weights, tap-major (dy, dx, c)
    Output position q (flat, padded spatial grid) accumulates
        sum_{dy,dx} W[dy,dx] @ x[q + (dy-1)*wp + (dx-1)].
    """
    cout = o_ref.shape[0]
    tp = o_ref.shape[1]
    # Stitch main + tail into one contiguous VMEM window (aligned stores).
    xw_ref[:, :tp] = xm_ref[...]
    xw_ref[:, tp:] = xt_ref[...]
    xw = xw_ref[...]
    wv = w_ref[...]
    acc = jnp.zeros((cout, tp), jnp.float32)
    for t in range(9):                       # unrolled: 9 small MXU matmuls
        dy, dx = divmod(t, 3)
        off = f + (dy - 1) * wp + (dx - 1)   # static lane offset, >= 0
        acc = acc + jnp.dot(wv[:, t * cin:(t + 1) * cin],
                            xw[:, off:off + tp],
                            preferred_element_type=jnp.float32)
    y = acc + b_ref[...]
    o_ref[...] = _epilogue(y, slope, o_ref.dtype)


# --------------------------------------------------------------------------
# conv wrappers (thin JAX glue around one pallas_call each)
# --------------------------------------------------------------------------

def conv1x1_pallas(x4, p, slope, residual4=None, ds=None,
                   out_dtype=jnp.bfloat16):
    """1x1 conv (+folded BN bias) [+ residual | + fused downsample GEMM]
    + LeakyReLU.  x4 / residual4 channels-first (C, N, H, W), bf16."""
    cfg = _vmem_config()
    c, n, h, w = x4.shape
    pix = n * h * w
    cout, k = p['wt'].shape
    assert k == c
    x2 = x4.reshape(c, pix)
    bias = p['b']

    res2 = None
    wd = xd2 = None
    kd = 0
    if ds is not None:
        pd, xs4 = ds
        wd = pd['wt']
        kd = wd.shape[1]
        xd2 = xs4.reshape(kd, pix)
        bias = bias + pd['b']                 # merge the two per-channel biases
    if residual4 is not None:
        res2 = residual4.reshape(cout, pix)

    # Only truly tiny pixel counts get padded (one vreg row); otherwise the
    # grid is cdiv(P, tp) and the final block is a masked partial block.
    pix_l = pix
    if pix < 128:
        padw = 128 - pix
        x2 = jnp.pad(x2, ((0, 0), (0, padw)))
        if res2 is not None:
            res2 = jnp.pad(res2, ((0, 0), (0, padw)))
        if xd2 is not None:
            xd2 = jnp.pad(xd2, ((0, 0), (0, padw)))
        pix_l = 128

    out_bytes = jnp.dtype(out_dtype).itemsize
    tp = _pick_tile_1x1(pix_l, k, cout, kd, res2 is not None, out_bytes, cfg)
    grid = (_cdiv(pix_l, tp),)
    bias2 = bias.reshape(cout, 1).astype(jnp.float32)

    in_specs = [pl.BlockSpec((cout, k), lambda i: (0, 0)),     # weights (resident)
                pl.BlockSpec((k, tp), lambda i: (0, i))]       # activations
    args = [p['wt'], x2]
    if ds is not None:
        in_specs += [pl.BlockSpec((cout, kd), lambda i: (0, 0)),
                     pl.BlockSpec((kd, tp), lambda i: (0, i))]
        args += [wd, xd2]
        kernel = functools.partial(_mm_ds_kernel, slope=slope)
    elif res2 is not None:
        kernel = functools.partial(_mm_res_kernel, slope=slope)
    else:
        kernel = functools.partial(_mm_kernel, slope=slope)
    in_specs.append(pl.BlockSpec((cout, 1), lambda i: (0, 0)))  # bias
    args.append(bias2)
    if res2 is not None and ds is None:
        in_specs.append(pl.BlockSpec((cout, tp), lambda i: (0, i)))
        args.append(res2)

    out = pl.pallas_call(
        kernel,
        out_shape=jax.ShapeDtypeStruct((cout, pix_l), out_dtype),
        grid=grid,
        in_specs=in_specs,
        out_specs=pl.BlockSpec((cout, tp), lambda i: (0, i)),
        compiler_params=pltpu.CompilerParams(
            dimension_semantics=("parallel",),
            vmem_limit_bytes=cfg['limit']),
    )(*args)
    if pix_l != pix:
        out = out[:, :pix]
    return out.reshape(cout, n, h, w)


def conv3x3_pallas(x4, p, stride, slope, out_dtype=jnp.bfloat16):
    """3x3 conv (pad=1, stride 1 or 2) + folded BN bias + LeakyReLU with
    in-kernel tap accumulation (no HBM im2col)."""
    cfg = _vmem_config()
    c, n, h, w = x4.shape
    cout, kk = p['wt'].shape
    assert kk == 9 * c
    hp, wp = h + 2, w + 2
    pf = n * hp * wp                       # flattened padded spatial grid
    h0 = wp + 1                            # max |flat tap offset|
    f = _round_up(h0, 128)                 # halo front shift (block aligned)

    out_bytes = jnp.dtype(out_dtype).itemsize
    tp = _pick_tile_3x3(pf, c, cout, f, out_bytes, cfg)
    nblk = _cdiv(pf, tp)
    total = nblk * tp + 2 * f

    # Spatial zero pad (conv padding) + flat halo shift.  XLA fuses the pads.
    # TODO(synk): this halo pad is the remaining wrapper-side copy; removable
    # with clamped boundary streams or a manual-DMA halo fetch.
    xf = jnp.pad(x4, ((0, 0), (0, 0), (1, 1), (1, 1))).reshape(c, pf)
    xh = jnp.pad(xf, ((0, 0), (f, total - f - pf)))

    bias2 = p['b'].reshape(cout, 1).astype(jnp.float32)
    step = tp // (2 * f)                   # tail-block stride in block units
    kernel = functools.partial(_conv3x3_kernel, slope=slope, cin=c, wp=wp, f=f)

    out = pl.pallas_call(
        kernel,
        out_shape=jax.ShapeDtypeStruct((cout, nblk * tp), out_dtype),
        grid=(nblk,),
        in_specs=[
            pl.BlockSpec((cout, 9 * c), lambda i: (0, 0)),                # weights
            pl.BlockSpec((c, tp), lambda i: (0, i)),                      # main window
            pl.BlockSpec((c, 2 * f), lambda i: (0, (i + 1) * step)),      # tail halo
            pl.BlockSpec((cout, 1), lambda i: (0, 0)),                    # bias
        ],
        out_specs=pl.BlockSpec((cout, tp), lambda i: (0, i)),
        scratch_shapes=[pltpu.VMEM((c, tp + 2 * f), jnp.bfloat16)],
        compiler_params=pltpu.CompilerParams(
            dimension_semantics=("parallel",),
            vmem_limit_bytes=cfg['limit']),
    )(p['wt'], xh, xh, bias2)

    # Valid conv outputs sit at padded-grid centers (1 + s*yo, 1 + s*xo).
    ho = (h - 1) // stride + 1
    wo = (w - 1) // stride + 1
    out = out[:, :pf].reshape(cout, n, hp, wp)
    return out[:, :, 1:1 + stride * ho:stride, 1:1 + stride * wo:stride]


# --------------------------------------------------------------------------
# pure-JAX reference (lax.conv) -- numerical cross-check only
# --------------------------------------------------------------------------

def conv_reference(x4, p, ksize, stride, padding, slope, residual4=None,
                   out_dtype=jnp.bfloat16):
    cout, kk = p['wt'].shape
    cin = kk // (ksize * ksize)
    w_hwio = p['wt'].T.reshape(ksize, ksize, cin, cout)
    x_nhwc = jnp.transpose(x4, (1, 2, 3, 0))
    y = jax.lax.conv_general_dilated(
        x_nhwc, w_hwio, (stride, stride),
        [(padding, padding), (padding, padding)],
        dimension_numbers=('NHWC', 'HWIO', 'NHWC'),
        preferred_element_type=jnp.float32)
    y = y + p['b'].reshape(1, 1, 1, cout)
    if residual4 is not None:
        y = y + jnp.transpose(residual4, (1, 2, 3, 0)).astype(jnp.float32)
    if slope != 1.0:
        y = jnp.maximum(y, slope * y)
    return jnp.transpose(y, (3, 0, 1, 2)).astype(out_dtype)


def conv_block(x4, p, ksize, stride, padding, slope, residual4=None, ds=None,
               use_pallas=True, out_dtype=jnp.bfloat16):
    if not use_pallas:
        if ds is not None:
            pd, xs4 = ds
            residual4 = conv_reference(xs4, pd, 1, 1, 0, 1.0,
                                       out_dtype=jnp.float32)
        return conv_reference(x4, p, ksize, stride, padding, slope,
                              residual4=residual4, out_dtype=out_dtype)
    if ksize == 1:
        return conv1x1_pallas(x4, p, slope, residual4=residual4, ds=ds,
                              out_dtype=out_dtype)
    assert residual4 is None and ds is None
    return conv3x3_pallas(x4, p, stride, slope, out_dtype=out_dtype)


# --------------------------------------------------------------------------
# model blocks
# --------------------------------------------------------------------------

EXPANSION = 4  # ResBlock.expansion


def resblock_forward(x4, p, use_pallas=True):
    s = p['stride']
    h1 = conv_block(x4, p['conv1'], 1, 1, 0, 0.2, use_pallas=use_pallas)
    h2 = conv_block(h1, p['conv2'], 3, s, 1, 0.2, use_pallas=use_pallas)
    if p['downsample'] is not None:
        # 1x1 stride-s conv == strided subsample + 1x1 GEMM, fused into conv3.
        xs = x4[:, :, ::s, ::s]
        return conv_block(h2, p['conv3'], 1, 1, 0, 0.01,
                          ds=(p['downsample'], xs), use_pallas=use_pallas)
    # conv3 + BN + residual add + LeakyReLU(default 0.01); dropout = identity
    return conv_block(h2, p['conv3'], 1, 1, 0, 0.01, residual4=x4,
                      use_pallas=use_pallas)


def encoder_forward(params, x_nchw, use_pallas=True):
    # NCHW -> channels-first (C, N, H, W), pixels-on-lanes working layout, bf16.
    x = jnp.transpose(x_nchw, (1, 0, 2, 3)).astype(jnp.bfloat16)
    x = conv_block(x, params['conv1'], 3, 1, 1, 0.2, use_pallas=use_pallas)
    for layer in params['layers']:
        for rb in layer:
            x = resblock_forward(x, rb, use_pallas=use_pallas)
    # conv2: 1x1 conv with bias, no norm / activation (slope=1.0 == identity)
    x = conv_block(x, params['conv2'], 1, 1, 0, 1.0, use_pallas=use_pallas,
                   out_dtype=jnp.float32)
    return jnp.transpose(x, (1, 0, 2, 3))                       # -> NCHW


# --------------------------------------------------------------------------
# parameter init (eval-mode BN folded into weights + single bias)
# --------------------------------------------------------------------------

class KeyGen:
    def __init__(self, key):
        self.key = key

    def __call__(self):
        self.key, k = jax.random.split(self.key)
        return k


def init_conv_bn(kg, kh, kw, cin, cout, eps=1e-5):
    fan_in = kh * kw * cin
    w = jax.random.normal(kg(), (fan_in, cout), jnp.float32) / np.sqrt(fan_in)
    b = 0.05 * jax.random.normal(kg(), (cout,), jnp.float32)
    gamma = 1.0 + 0.1 * jax.random.normal(kg(), (cout,), jnp.float32)
    beta = 0.1 * jax.random.normal(kg(), (cout,), jnp.float32)
    mean = 0.1 * jax.random.normal(kg(), (cout,), jnp.float32)
    var = 1.0 + 0.1 * jax.random.uniform(kg(), (cout,), jnp.float32)
    scale = gamma / jnp.sqrt(var + eps)
    bias = beta - mean * scale + b * scale
    wt = (w * scale[None, :]).T.astype(jnp.bfloat16)   # (cout, K), K=(dy,dx,c)
    return {'wt': wt, 'b': bias.astype(jnp.float32)}


def init_conv(kg, kh, kw, cin, cout):
    fan_in = kh * kw * cin
    w = jax.random.normal(kg(), (fan_in, cout), jnp.float32) / np.sqrt(fan_in)
    b = 0.05 * jax.random.normal(kg(), (cout,), jnp.float32)
    return {'wt': w.T.astype(jnp.bfloat16), 'b': b}


def init_resblock(kg, in_c, out_c, stride, downsample):
    p = {'stride': stride}
    p['conv1'] = init_conv_bn(kg, 1, 1, in_c, out_c)
    p['conv2'] = init_conv_bn(kg, 3, 3, out_c, out_c)
    p['conv3'] = init_conv_bn(kg, 1, 1, out_c, out_c * EXPANSION)
    p['downsample'] = (init_conv_bn(kg, 1, 1, in_c, out_c * EXPANSION)
                       if downsample else None)
    return p


def init_encoder(key, num_chans, in_chans, z_dim, channel_multipliers, blocks):
    kg = KeyGen(key)
    params = {'conv1': init_conv_bn(kg, 3, 3, num_chans, in_chans)}
    dim = in_chans
    layers = []
    for factor in channel_multipliers:
        planes = factor * in_chans
        layer = [init_resblock(kg, dim, planes, stride=2, downsample=True)]
        dim = planes * EXPANSION
        for _ in range(blocks - 1):
            layer.append(init_resblock(kg, dim, planes, stride=1,
                                       downsample=False))
        layers.append(layer)
    params['layers'] = layers
    params['conv2'] = init_conv(kg, 1, 1, dim, z_dim * 2)
    return params


# --------------------------------------------------------------------------
# main
# --------------------------------------------------------------------------

if __name__ == "__main__":
    key = jax.random.PRNGKey(0)
    kp, kx = jax.random.split(key)

    # Small config consistent with the module defaults (scaled down).
    num_chans = 4
    in_chans = 8
    z_dim = 4
    channel_multipliers = [1, 2]
    blocks = 2

    params = init_encoder(kp, num_chans, in_chans, z_dim,
                          channel_multipliers, blocks)
    x = jax.random.normal(kx, (2, num_chans, 16, 16), jnp.float32)

    # --- unit check: in-kernel 3x3 tap accumulation vs lax.conv (f32) ------
    x4 = jnp.transpose(x, (1, 0, 2, 3)).astype(jnp.bfloat16)
    for s in (1, 2):
        yp = conv3x3_pallas(x4, params['conv1'], stride=s, slope=0.2,
                            out_dtype=jnp.float32)
        yr = conv_reference(x4, params['conv1'], 3, s, 1, 0.2,
                            out_dtype=jnp.float32)
        np.testing.assert_allclose(np.asarray(jax.block_until_ready(yp)),
                                   np.asarray(yr), rtol=1e-2, atol=1e-2)

    # --- full encoder forward ----------------------------------------------
    fwd = jax.jit(lambda inp: encoder_forward(params, inp, use_pallas=True))
    out = jax.block_until_ready(fwd(x))

    # expected: spatial halved per layer (16 -> 8 -> 4), channels = 2*z_dim
    assert out.shape == (2, 2 * z_dim, 4, 4), out.shape

    # cross-check against a pure-JAX (lax.conv) reference of the same bf16 math
    ref = jax.block_until_ready(encoder_forward(params, x, use_pallas=False))
    np.testing.assert_allclose(np.asarray(out), np.asarray(ref),
                               rtol=3e-2, atol=3e-2)

    print("KERNEL_OK")
</pallas_src>

<mosaic_0001>
module attributes {stable_mosaic.version = 11 : i64} {
  func.func @_conv3x3_kernel(%arg0: i32, %arg1: memref<8x36xbf16, #tpu.memory_space<vmem>>, %arg2: memref<4x512xbf16, #tpu.memory_space<vmem>>, %arg3: memref<4x256xbf16, #tpu.memory_space<vmem>>, %arg4: memref<8x1xf32, #tpu.memory_space<vmem>>, %arg5: memref<8x512xf32, #tpu.memory_space<vmem>>, %arg6: memref<4x768xbf16, #tpu.memory_space<vmem>>) attributes {dimension_semantics = [#tpu.dimension_semantics<parallel>], iteration_bounds = array<i64: 2>, scalar_prefetch = 0 : i64, scratch_operands = 1 : i64, tpu.core_type = #tpu.core_type<tc>, window_params = [{pipeline_mode = #tpu.pipeline_mode<synchronous>, transform_indices = @transform_0, window_bounds = array<i64: 8, 36>}, {transform_indices = @transform_1, window_bounds = array<i64: 4, 512>}, {transform_indices = @transform_2, window_bounds = array<i64: 4, 256>}, {pipeline_mode = #tpu.pipeline_mode<synchronous>, transform_indices = @transform_3, window_bounds = array<i64: 8, 1>}, {transform_indices = @transform_4, window_bounds = array<i64: 8, 512>}]} {
    %c0 = arith.constant 0 : index
    %c0_0 = arith.constant 0 : index
    %0 = vector.load %arg2[%c0, %c0_0] : memref<4x512xbf16, #tpu.memory_space<vmem>>, vector<4x512xbf16>
    %c0_1 = arith.constant 0 : index
    %c0_2 = arith.constant 0 : index
    %1 = vector.load %arg6[%c0_1, %c0_2] : memref<4x768xbf16, #tpu.memory_space<vmem>>, vector<4x512xbf16>
    tpu.vector_store %arg6[%c0_1, %c0_2], %0 {strides = array<i32>} : memref<4x768xbf16, #tpu.memory_space<vmem>>, vector<4x512xbf16>,
    %c0_3 = arith.constant 0 : index
    %c0_4 = arith.constant 0 : index
    %2 = vector.load %arg3[%c0_3, %c0_4] : memref<4x256xbf16, #tpu.memory_space<vmem>>, vector<4x256xbf16>
    %c0_5 = arith.constant 0 : index
    %c512 = arith.constant 512 : index
    %3 = vector.load %arg6[%c0_5, %c512] : memref<4x768xbf16, #tpu.memory_space<vmem>>, vector<4x256xbf16>
    tpu.vector_store %arg6[%c0_5, %c512], %2 {strides = array<i32>} : memref<4x768xbf16, #tpu.memory_space<vmem>>, vector<4x256xbf16>,
    %c0_6 = arith.constant 0 : index
    %c0_7 = arith.constant 0 : index
    %4 = vector.load %arg6[%c0_6, %c0_7] : memref<4x768xbf16, #tpu.memory_space<vmem>>, vector<4x768xbf16>
    %c0_8 = arith.constant 0 : index
    %c0_9 = arith.constant 0 : index
    %5 = vector.load %arg1[%c0_8, %c0_9] : memref<8x36xbf16, #tpu.memory_space<vmem>>, vector<8x36xbf16>
    %cst = arith.constant 0.000000e+00 : f32
    %6 = vector.broadcast %cst : f32 to vector<8x512xf32>
    %7 = vector.extract_strided_slice %5 {offsets = [0, 0], sizes = [8, 4], strides = [1, 1]} : vector<8x36xbf16> to vector<8x4xbf16>
    %8 = vector.extract_strided_slice %4 {offsets = [0, 109], sizes = [4, 512], strides = [1, 1]} : vector<4x768xbf16> to vector<4x512xbf16>
    %cst_10 = arith.constant dense<0.000000e+00> : vector<8x512xf32>
    %9 = tpu.matmul %7, %8, %cst_10 {dimension_numbers = #tpu.dot_dimension_numbers<[1], [0], [0], [1], [0, 0, 1, 1], [], []>} : vector<8x4xbf16>, vector<4x512xbf16>, vector<8x512xf32> -> vector<8x512xf32>
    %10 = arith.addf %6, %9 : vector<8x512xf32>
    %11 = vector.extract_strided_slice %5 {offsets = [0, 4], sizes = [8, 4], strides = [1, 1]} : vector<8x36xbf16> to vector<8x4xbf16>
    %12 = vector.extract_strided_slice %4 {offsets = [0, 110], sizes = [4, 512], strides = [1, 1]} : vector<4x768xbf16> to vector<4x512xbf16>
    %cst_11 = arith.constant dense<0.000000e+00> : vector<8x512xf32>
    %13 = tpu.matmul %11, %12, %cst_11 {dimension_numbers = #tpu.dot_dimension_numbers<[1], [0], [0], [1], [0, 0, 1, 1], [], []>} : vector<8x4xbf16>, vector<4x512xbf16>, vector<8x512xf32> -> vector<8x512xf32>
    %14 = arith.addf %10, %13 : vector<8x512xf32>
    %15 = vector.extract_strided_slice %5 {offsets = [0, 8], sizes = [8, 4], strides = [1, 1]} : vector<8x36xbf16> to vector<8x4xbf16>
    %16 = vector.extract_strided_slice %4 {offsets = [0, 111], sizes = [4, 512], strides = [1, 1]} : vector<4x768xbf16> to vector<4x512xbf16>
    %cst_12 = arith.constant dense<0.000000e+00> : vector<8x512xf32>
    %17 = tpu.matmul %15, %16, %cst_12 {dimension_numbers = #tpu.dot_dimension_numbers<[1], [0], [0], [1], [0, 0, 1, 1], [], []>} : vector<8x4xbf16>, vector<4x512xbf16>, vector<8x512xf32> -> vector<8x512xf32>
    %18 = arith.addf %14, %17 : vector<8x512xf32>
    %19 = vector.extract_strided_slice %5 {offsets = [0, 12], sizes = [8, 4], strides = [1, 1]} : vector<8x36xbf16> to vector<8x4xbf16>
    %20 = vector.extract_strided_slice %4 {offsets = [0, 127], sizes = [4, 512], strides = [1, 1]} : vector<4x768xbf16> to vector<4x512xbf16>
    %cst_13 = arith.constant dense<0.000000e+00> : vector<8x512xf32>
    %21 = tpu.matmul %19, %20, %cst_13 {dimension_numbers = #tpu.dot_dimension_numbers<[1], [0], [0], [1], [0, 0, 1, 1], [], []>} : vector<8x4xbf16>, vector<4x512xbf16>, vector<8x512xf32> -> vector<8x512xf32>
    %22 = arith.addf %18, %21 : vector<8x512xf32>
    %23 = vector.extract_strided_slice %5 {offsets = [0, 16], sizes = [8, 4], strides = [1, 1]} : vector<8x36xbf16> to vector<8x4xbf16>
    %24 = vector.extract_strided_slice %4 {offsets = [0, 128], sizes = [4, 512], strides = [1, 1]} : vector<4x768xbf16> to vector<4x512xbf16>
    %cst_14 = arith.constant dense<0.000000e+00> : vector<8x512xf32>
    %25 = tpu.matmul %23, %24, %cst_14 {dimension_numbers = #tpu.dot_dimension_numbers<[1], [0], [0], [1], [0, 0, 1, 1], [], []>} : vector<8x4xbf16>, vector<4x512xbf16>, vector<8x512xf32> -> vector<8x512xf32>
    %26 = arith.addf %22, %25 : vector<8x512xf32>
    %27 = vector.extract_strided_slice %5 {offsets = [0, 20], sizes = [8, 4], strides = [1, 1]} : vector<8x36xbf16> to vector<8x4xbf16>
    %28 = vector.extract_strided_slice %4 {offsets = [0, 129], sizes = [4, 512], strides = [1, 1]} : vector<4x768xbf16> to vector<4x512xbf16>
    %cst_15 = arith.constant dense<0.000000e+00> : vector<8x512xf32>
    %29 = tpu.matmul %27, %28, %cst_15 {dimension_numbers = #tpu.dot_dimension_numbers<[1], [0], [0], [1], [0, 0, 1, 1], [], []>} : vector<8x4xbf16>, vector<4x512xbf16>, vector<8x512xf32> -> vector<8x512xf32>
    %30 = arith.addf %26, %29 : vector<8x512xf32>
    %31 = vector.extract_strided_slice %5 {offsets = [0, 24], sizes = [8, 4], strides = [1, 1]} : vector<8x36xbf16> to vector<8x4xbf16>
    %32 = vector.extract_strided_slice %4 {offsets = [0, 145], sizes = [4, 512], strides = [1, 1]} : vector<4x768xbf16> to vector<4x512xbf16>
    %cst_16 = arith.constant dense<0.000000e+00> : vector<8x512xf32>
    %33 = tpu.matmul %31, %32, %cst_16 {dimension_numbers = #tpu.dot_dimension_numbers<[1], [0], [0], [1], [0, 0, 1, 1], [], []>} : vector<8x4xbf16>, vector<4x512xbf16>, vector<8x512xf32> -> vector<8x512xf32>
    %34 = arith.addf %30, %33 : vector<8x512xf32>
    %35 = vector.extract_strided_slice %5 {offsets = [0, 28], sizes = [8, 4], strides = [1, 1]} : vector<8x36xbf16> to vector<8x4xbf16>
    %36 = vector.extract_strided_slice %4 {offsets = [0, 146], sizes = [4, 512], strides = [1, 1]} : vector<4x768xbf16> to vector<4x512xbf16>
    %cst_17 = arith.constant dense<0.000000e+00> : vector<8x512xf32>
    %37 = tpu.matmul %35, %36, %cst_17 {dimension_numbers = #tpu.dot_dimension_numbers<[1], [0], [0], [1], [0, 0, 1, 1], [], []>} : vector<8x4xbf16>, vector<4x512xbf16>, vector<8x512xf32> -> vector<8x512xf32>
    %38 = arith.addf %34, %37 : vector<8x512xf32>
    %39 = vector.extract_strided_slice %5 {offsets = [0, 32], sizes = [8, 4], strides = [1, 1]} : vector<8x36xbf16> to vector<8x4xbf16>
    %40 = vector.extract_strided_slice %4 {offsets = [0, 147], sizes = [4, 512], strides = [1, 1]} : vector<4x768xbf16> to vector<4x512xbf16>
    %cst_18 = arith.constant dense<0.000000e+00> : vector<8x512xf32>
    %41 = tpu.matmul %39, %40, %cst_18 {dimension_numbers = #tpu.dot_dimension_numbers<[1], [0], [0], [1], [0, 0, 1, 1], [], []>} : vector<8x4xbf16>, vector<4x512xbf16>, vector<8x512xf32> -> vector<8x512xf32>
    %42 = arith.addf %38, %41 : vector<8x512xf32>
    %c0_19 = arith.constant 0 : index
    %c0_20 = arith.constant 0 : index
    %43 = vector.load %arg4[%c0_19, %c0_20] : memref<8x1xf32, #tpu.memory_space<vmem>>, vector<8x1xf32>
    %44 = vector.broadcast %43 : vector<8x1xf32> to vector<8x512xf32>
    %45 = arith.addf %42, %44 : vector<8x512xf32>
    %cst_21 = arith.constant 2.000000e-01 : f32
    %46 = vector.broadcast %cst_21 : f32 to vector<8x512xf32>
    %47 = arith.mulf %46, %45 : vector<8x512xf32>
    %48 = arith.maximumf %45, %47 : vector<8x512xf32>
    %c0_22 = arith.constant 0 : index
    %c0_23 = arith.constant 0 : index
    %49 = vector.load %arg5[%c0_22, %c0_23] : memref<8x512xf32, #tpu.memory_space<vmem>>, vector<8x512xf32>
    tpu.vector_store %arg5[%c0_22, %c0_23], %48 {strides = array<i32>} : memref<8x512xf32, #tpu.memory_space<vmem>>, vector<8x512xf32>,
    return
  }
  func.func @transform_0(%arg0: i32) -> (i32, i32) {
    %c0_i32 = arith.constant 0 : i32
    %c0_i32_0 = arith.constant 0 : i32
    %c0_i32_1 = arith.constant 0 : i32
    return %c0_i32, %c0_i32_0 : i32, i32
  }
  func.func @transform_1(%arg0: i32) -> (i32, i32) {
    %c0_i32 = arith.constant 0 : i32
    %c0_i32_0 = arith.constant 0 : i32
    return %c0_i32, %arg0 : i32, i32
  }
  func.func @transform_2(%arg0: i32) -> (i32, i32) {
    %c1_i32 = arith.constant 1 : i32
    %0 = arith.addi %arg0, %c1_i32 : i32
    %c2_i32 = arith.constant 2 : i32
    %1 = arith.muli %0, %c2_i32 : i32
    %c0_i32 = arith.constant 0 : i32
    %c0_i32_0 = arith.constant 0 : i32
    return %c0_i32, %1 : i32, i32
  }
  func.func @transform_3(%arg0: i32) -> (i32, i32) {
    %c0_i32 = arith.constant 0 : i32
    %c0_i32_0 = arith.constant 0 : i32
    %c0_i32_1 = arith.constant 0 : i32
    return %c0_i32, %c0_i32_0 : i32, i32
  }
  func.func @transform_4(%arg0: i32) -> (i32, i32) {
    %c0_i32 = arith.constant 0 : i32
    %c0_i32_0 = arith.constant 0 : i32
    return %c0_i32, %arg0 : i32, i32
  }
}

</mosaic_0001>

<llo_original>
// kernel: tpu_custom_call.1
$region0: #{tpu_custom_call.1}
  #allocation0 [shape = 'u32[]', space=smem, size = 0x4, offset = 0x4, fixed_abs, tag = 'smem constant byte address 0x4 - core index']
  #allocation1 [shape = 'u32[144,128]{1,0:T(1,128)}', space=vmem, size = 0x12000, scoped, tag = 'internal scratch']
  #allocation2 [shape = 'bf16[4,768]{1,0:T(4,128)(2,1)}', space=vmem, size = 0x1800, scoped, tag = 'scratch operand']
  %s0 = inlined_call_operand.vmem [shape: bf16[8,36], index: 0, kind: input, shape index: {}]
  %s1 = inlined_call_operand.hbm [shape: bf16[4,1280], index: 1, kind: input, shape index: {}]
  %s2 = inlined_call_operand.hbm [shape: bf16[4,1280], index: 2, kind: input, shape index: {}]
  %s3 = inlined_call_operand.vmem [shape: f32[8,1], index: 3, kind: input, shape index: {}]
  %s4 = inlined_call_operand.hbm [shape: f32[8,1024], index: 4, kind: output, shape index: {}]
  %s5 = sld [smem:[#allocation0]]
  $region57: #{tpu_custom_call.1} parent=0
    _
  %s7 = ssub.s32 1, %s5
  %s8 = scalar_select 0, %s7, %s5
  $region1: #{tpu_custom_call.1} parent=0
    #allocation3 [shape = 'u8[8192]{0}', space=vmem, size = 0x2000, scoped, tag = 'input window, operand 1']
    #allocation4 [shape = 's32[2]{0}', space=sflag, size = 0x8, scoped, tag = 'scoped memory for tpu_custom_call.1']
    #allocation5 [shape = 's32[2]{0}', space=sflag, size = 0x8, scoped, tag = 'scoped memory for tpu_custom_call.1']
    #allocation6 [shape = 'u8[4096]{0}', space=vmem, size = 0x1000, scoped, tag = 'input window, operand 2']
    #allocation7 [shape = 's32[2]{0}', space=sflag, size = 0x8, scoped, tag = 'scoped memory for tpu_custom_call.1']
    #allocation8 [shape = 'u8[32768]{0}', space=vmem, size = 0x8000, scoped, tag = 'output window, operand 0']
    %9 = vsyncpa [#allocation4], 0
    %s10 = scalar_lea.sflag [#allocation4], 1
    %11 = vsyncpa %s10, 0
    %12 = vsyncpa [#allocation7], 0
    %s13 = scalar_lea.sflag [#allocation7], 1
    %14 = vsyncpa %s13, 0
    %15 = vsyncpa [#allocation5], 0
    %s16 = scalar_lea.sflag [#allocation5], 1
    %17 = vsyncpa %s16, 0
    loop: start=0, step=1, limit=4
    $region2: #{tpu_custom_call.1} parent=1 // loop_pre_header
      _
    $region3: #{tpu_custom_call.1} parent=1 // loop_header
      %s19 = sphi 0, %s23
      %p20 = scmp.ge.s32.totalorder %s19, 4
      %s27 = sphi 0, %s27
      %s29 = sphi 0, %s27
      %s30 = sphi 0, %s29
      %s44 = sphi 0, %s30
      %s50 = sphi 0, %s52
      %s53 = sphi 0, %s50
      %s54 = sphi 0, %s53
      %s70 = sphi 0, %s54
      %s80 = sphi 0, %s82
      %s83 = sphi 0, %s80
      %s84 = sphi 0, %s83
      %s100 = sphi 0, %s84
      %s104 = sphi 0, %s104
      %s106 = sphi 0, %s104
      %s107 = sphi 0, %s106
      %s121 = sphi 0, %s107
      %s127 = sphi 0, %s129
      %s130 = sphi 0, %s127
      %s131 = sphi 0, %s130
      %s147 = sphi 0, %s131
    $region4: #{tpu_custom_call.1} parent=1 // loop_header_branch
      %22 = sbr.rel (%p20) target = $region8
    $region5: #{tpu_custom_call.1} parent=1 // loop_body
      %s24 = ssub.s32 %s19, 1
      %s25 = ssub.s32 %s19, 2
      %s26 = sadd.s32 %s19, 1
      %s28 = sadd.s32 %s27, 1
      %p31 = scmp.eq.s32.totalorder %s19, 1
      %p32 = scmp.ne.s32.totalorder %s27, %s29
      %p33 = scmp.eq.s32.totalorder %s19, 0
      %p34 = por %p32, %p33
      %p35 = scmp.ne.s32.totalorder %s27, %s29
      %p36 = scmp.eq.s32.totalorder %s24, 1
      %p37 = por %p35, %p36
      %p38 = scmp.ne.s32.totalorder %s29, %s30
      %p39 = scmp.eq.s32.totalorder %s24, 0
      %p40 = por %p38, %p39
      %p41 = scmp.ne.s32.totalorder %s29, %s30
      %p42 = scmp.eq.s32.totalorder %s25, 1
      %p43 = por %p41, %p42
      %p45 = scmp.ne.s32.totalorder %s30, %s44
      %p46 = scmp.eq.s32.totalorder %s25, 0
      %p47 = por %p45, %p46
      %s48 = ssub.s32 %s19, %s26
      %p49 = scmp.eq.s32.totalorder %s48, 0
      %s51 = sadd.s32 %s50, 1
      %s52 = scalar_select %p49, %s50, %s51
      %p55 = pneg %p49
      %p56 = scmp.eq.s32.totalorder %s19, 1
      %p57 = por %p55, %p56
      %p58 = scmp.ne.s32.totalorder %s50, %s53
      %p59 = scmp.eq.s32.totalorder %s19, 0
      %p60 = por %p58, %p59
      %p61 = scmp.ne.s32.totalorder %s50, %s53
      %p62 = scmp.eq.s32.totalorder %s24, 1
      %p63 = por %p61, %p62
      %p64 = scmp.ne.s32.totalorder %s53, %s54
      %p65 = scmp.eq.s32.totalorder %s24, 0
      %p66 = por %p64, %p65
      %p67 = scmp.ne.s32.totalorder %s53, %s54
      %p68 = scmp.eq.s32.totalorder %s25, 1
      %p69 = por %p67, %p68
      %p71 = scmp.ne.s32.totalorder %s54, %s70
      %p72 = scmp.eq.s32.totalorder %s25, 0
      %p73 = por %p71, %p72
      %s74 = sadd.s32 %s19, 1
      %s75 = smul.u32 %s74, 2
      %s76 = sadd.s32 %s26, 1
      %s77 = smul.u32 %s76, 2
      %s78 = ssub.s32 %s75, %s77
      %p79 = scmp.eq.s32.totalorder %s78, 0
      %s81 = sadd.s32 %s80, 1
      %s82 = scalar_select %p79, %s80, %s81
      %p85 = pneg %p79
      %p86 = scmp.eq.s32.totalorder %s19, 1
      %p87 = por %p85, %p86
      %p88 = scmp.ne.s32.totalorder %s80, %s83
      %p89 = scmp.eq.s32.totalorder %s19, 0
      %p90 = por %p88, %p89
      %p91 = scmp.ne.s32.totalorder %s80, %s83
      %p92 = scmp.eq.s32.totalorder %s24, 1
      %p93 = por %p91, %p92
      %p94 = scmp.ne.s32.totalorder %s83, %s84
      %p95 = scmp.eq.s32.totalorder %s24, 0
      %p96 = por %p94, %p95
      %p97 = scmp.ne.s32.totalorder %s83, %s84
      %p98 = scmp.eq.s32.totalorder %s25, 1
      %p99 = por %p97, %p98
      %p101 = scmp.ne.s32.totalorder %s84, %s100
      %p102 = scmp.eq.s32.totalorder %s25, 0
      %p103 = por %p101, %p102
      %s105 = sadd.s32 %s104, 1
      %p108 = scmp.eq.s32.totalorder %s19, 1
      %p109 = scmp.ne.s32.totalorder %s104, %s106
      %p110 = scmp.eq.s32.totalorder %s19, 0
      %p111 = por %p109, %p110
      %p112 = scmp.ne.s32.totalorder %s104, %s106
      %p113 = scmp.eq.s32.totalorder %s24, 1
      %p114 = por %p112, %p113
      %p115 = scmp.ne.s32.totalorder %s106, %s107
      %p116 = scmp.eq.s32.totalorder %s24, 0
      %p117 = por %p115, %p116
      %p118 = scmp.ne.s32.totalorder %s106, %s107
      %p119 = scmp.eq.s32.totalorder %s25, 1
      %p120 = por %p118, %p119
      %p122 = scmp.ne.s32.totalorder %s107, %s121
      %p123 = scmp.eq.s32.totalorder %s25, 0
      %p124 = por %p122, %p123
      %s125 = ssub.s32 %s19, %s26
      %p126 = scmp.eq.s32.totalorder %s125, 0
      %s128 = sadd.s32 %s127, 1
      %s129 = scalar_select %p126, %s127, %s128
      %p132 = pneg %p126
      %p133 = scmp.eq.s32.totalorder %s19, 1
      %p134 = por %p132, %p133
      %p135 = scmp.ne.s32.totalorder %s127, %s130
      %p136 = scmp.eq.s32.totalorder %s19, 0
      %p137 = por %p135, %p136
      %p138 = scmp.ne.s32.totalorder %s127, %s130
      %p139 = scmp.eq.s32.totalorder %s24, 1
      %p140 = por %p138, %p139
      %p141 = scmp.ne.s32.totalorder %s130, %s131
      %p142 = scmp.eq.s32.totalorder %s24, 0
      %p143 = por %p141, %p142
      %p144 = scmp.ne.s32.totalorder %s130, %s131
      %p145 = scmp.eq.s32.totalorder %s25, 1
      %p146 = por %p144, %p145
      %p148 = scmp.ne.s32.totalorder %s131, %s147
      %p149 = scmp.eq.s32.totalorder %s25, 0
      %p150 = por %p148, %p149
      %p151 = scmp.le.s32.totalorder 1, %s19
      %p152 = scmp.lt.s32.totalorder %s19, 3
      %p153 = pnand %p151, %p152
      %p154 = pneg %p153
      // Predicated region
      $region9: #{tpu_custom_call.1} parent=5 // pred_check
        _
      $region10: #{tpu_custom_call.1} parent=5 // pred_check_branch
        %156 = sbr.rel (%p153) target = $region12
      $region11: #{tpu_custom_call.1} parent=5 // pred_region
        %s157 = ssub.s32 %s19, 1
        // Predicated region
        $region13: #{tpu_custom_call.1} parent=11 // pred_check
          %p158 = pneg %p40
        $region14: #{tpu_custom_call.1} parent=11 // pred_check_branch
          %160 = sbr.rel (%p158) target = $region16
        $region15: #{tpu_custom_call.1} parent=11 // pred_region
          _
        $region16: #{tpu_custom_call.1} parent=11 // pred_fallthru
          _
        // Predicated region
        $region17: #{tpu_custom_call.1} parent=11 // pred_check
          %p161 = pneg %p117
        $region18: #{tpu_custom_call.1} parent=11 // pred_check_branch
          %163 = sbr.rel (%p161) target = $region20
        $region19: #{tpu_custom_call.1} parent=11 // pred_region
          _
        $region20: #{tpu_custom_call.1} parent=11 // pred_fallthru
          _
      $region12: #{tpu_custom_call.1} parent=5 // pred_fallthru
        _
      %p164 = scmp.lt.s32.totalorder %s19, 2
      // Predicated region
      $region21: #{tpu_custom_call.1} parent=5 // pred_check
        %p165 = pneg %p164
      $region22: #{tpu_custom_call.1} parent=5 // pred_check_branch
        %167 = sbr.rel (%p165) target = $region24
      $region23: #{tpu_custom_call.1} parent=5 // pred_region
        // Predicated region
        $region25: #{tpu_custom_call.1} parent=23 // pred_check
          %p168 = pneg %p60
        $region26: #{tpu_custom_call.1} parent=23 // pred_check_branch
          %170 = sbr.rel (%p168) target = $region28
        $region27: #{tpu_custom_call.1} parent=23 // pred_region
          %s171 = sand.u32 %s50, 1
          %s172 = scalar_lea.sflag [#allocation4], %s171
          %s173 = sand.u32 %s50, 1
          %s174 = smul.addr %s173, 8
          %s175 = scalar_lea.vmem [#allocation3], %s174
          %s176 = smul.u32 4, %s19
          %s177 = ssub.s32 10, %s176
          %p178 = scmp.lt.s32.totalorder %s177, 4
          %s179 = scalar_select %p178, %s177, 4
          %s180 = smul.u32 32, %s179
          %s182 = ssub.s32 128, %s180
          %183 = vsyncadd %s172, %s182
          %p184 = scmp.ne.s32.totalorder 0, %s180
          %s185 = smul.addr %s176, 32
          %s186 = scalar_lea.hbm %s1, %s185
          %s187 = smul.u32 %s179, 2
          %s188 = sshll.u32 %s187, 4
          %s189 = sshll.u32 %s175, 4
          %s190 = int_to_ptr.vmem [resolvable:$true] %s189
          %192 = dma.hbm_to_vmem [thread:$0]  (%p184), %s186, %s188, %s190, %s172
        $region28: #{tpu_custom_call.1} parent=23 // pred_fallthru
          _
        // Predicated region
        $region29: #{tpu_custom_call.1} parent=23 // pred_check
          %p193 = pneg %p90
        $region30: #{tpu_custom_call.1} parent=23 // pred_check_branch
          %195 = sbr.rel (%p193) target = $region32
        $region31: #{tpu_custom_call.1} parent=23 // pred_region
          %s196 = sand.u32 %s80, 1
          %s197 = scalar_lea.sflag [#allocation7], %s196
          %s198 = sand.u32 %s80, 1
          %s199 = smul.addr %s198, 4
          %s200 = scalar_lea.vmem [#allocation6], %s199
          %s201 = sadd.s32 %s19, 1
          %s202 = smul.u32 %s201, 2
          %s203 = smul.u32 2, %s202
          %s205 = ssub.s32 64, 64
          %206 = vsyncadd %s197, %s205
          %s207 = smul.addr %s203, 32
          %s208 = scalar_lea.hbm %s2, %s207
          %s210 = sshll.u32 %s200, 4
          %s211 = int_to_ptr.vmem [resolvable:$true] %s210
          %213 = dma.hbm_to_vmem [thread:$0]  %s208, 64, %s211, %s197
        $region32: #{tpu_custom_call.1} parent=23 // pred_fallthru
          _
      $region24: #{tpu_custom_call.1} parent=5 // pred_fallthru
        _
      %p214 = scmp.le.s32.totalorder 1, %s19
      %p215 = scmp.lt.s32.totalorder %s19, 3
      %p216 = pnand %p214, %p215
      %p217 = pneg %p216
      // Predicated region
      $region33: #{tpu_custom_call.1} parent=5 // pred_check
        _
      $region34: #{tpu_custom_call.1} parent=5 // pred_check_branch
        %219 = sbr.rel (%p216) target = $region36
      $region35: #{tpu_custom_call.1} parent=5 // pred_region
        %s220 = ssub.s32 %s19, 1
        %s221 = sand.u32 %s53, 1
        %s222 = scalar_lea.sflag [#allocation4], %s221
        %s223 = sand.u32 %s53, 1
        %s224 = smul.addr %s223, 8
        %s225 = scalar_lea.vmem [#allocation3], %s224
        // Predicated region
        $region37: #{tpu_custom_call.1} parent=35 // pred_check
          %p226 = pneg %p66
        $region38: #{tpu_custom_call.1} parent=35 // pred_check_branch
          %228 = sbr.rel (%p226) target = $region40
        $region39: #{tpu_custom_call.1} parent=35 // pred_region
          %229 = dma.done %s222, 128
        $region40: #{tpu_custom_call.1} parent=35 // pred_fallthru
          _
        %s230 = sand.u32 %s83, 1
        %s231 = scalar_lea.sflag [#allocation7], %s230
        %s232 = sand.u32 %s83, 1
        %s233 = smul.addr %s232, 4
        %s234 = scalar_lea.vmem [#allocation6], %s233
        // Predicated region
        $region41: #{tpu_custom_call.1} parent=35 // pred_check
          %p235 = pneg %p96
        $region42: #{tpu_custom_call.1} parent=35 // pred_check_branch
          %237 = sbr.rel (%p235) target = $region44
        $region43: #{tpu_custom_call.1} parent=35 // pred_region
          %238 = dma.done %s231, 64
        $region44: #{tpu_custom_call.1} parent=35 // pred_fallthru
          _
        %p239 = pneg %p40
        %p240 = pneg %p37
        %s241 = sand.u32 %s53, 1
        %s242 = scalar_lea.sflag [#allocation4], %s241
        %s243 = sand.u32 %s53, 1
        %s244 = smul.addr %s243, 8
        %s245 = scalar_lea.vmem [#allocation3], %s244
        %p246 = pneg %p66
        %p247 = pneg %p63
        %s248 = sand.u32 %s83, 1
        %s249 = scalar_lea.sflag [#allocation7], %s248
        %s250 = sand.u32 %s83, 1
        %s251 = smul.addr %s250, 4
        %s252 = scalar_lea.vmem [#allocation6], %s251
        %p253 = pneg %p96
        %p254 = pneg %p93
        %p255 = pneg %p117
        %p256 = pneg %p114
        %p257 = pneg %p143
        %p258 = pneg %p140
        %s259 = sand.u32 %s130, 1
        %s260 = scalar_lea.sflag [#allocation5], %s259
        %s261 = sand.u32 %s130, 1
        %s262 = smul.addr %s261, 32
        %s263 = scalar_lea.vmem [#allocation8], %s262
        %s264 = smul.u32 4, %s24
        %s265 = ssub.s32 10, %s264
        %p266 = scmp.lt.s32.totalorder %s265, 4
        %s267 = scalar_select %p266, %s265, 4
        %s268 = smul.u32 32, %s267
        %s269 = sadd.s32 %s24, 1
        %s270 = smul.u32 %s269, 2
        %s271 = smul.u32 2, %s270
        %s272 = smul.u32 4, %s24
        %v274 = vld [vmem:[%s225] sm:$0xff]
        %275 = vst [vmem:[#allocation2] sm:$0xff] %v274
        %v276 = vld [vmem:[%s234] sm:$0xf]
        %277 = vst [vmem:[#allocation2 + $0x8] sm:$0xf] %v276
        %v278 = vld [vmem:[#allocation2] sm:$0xff]
        %v279 = vld [vmem:[#allocation2 + $0x8] sm:$0xf]
        %v280 = vld [vmem:[%s0] sm:$0xf]
        %v282 = vunpack.c.l.b16 %v280
        %v283 = vpack.c.b16 %v282, %v282
        %284 = vrot.lane.b32.xlu0 %v283, 124
        %v285 = vpop.permute.xlu0 %284
        %v288 = vcombine.high %v278, %v278
        %v290 = vunpack.c.l.s4 1983009808
        %v291 = vunpack.c.0.s8 %v290
        %v292 = vlaneseq
        %v293 = vshrl.u32 %v292, 7
        %v294 = vsub.s32 %v291, %v293
        %v295 = vrot.slane %v278, %v294
        %v297 = vunpack.c.l.s4 1983009808
        %v298 = vunpack.c.0.s8 %v297
        %v299 = vlaneseq
        %v300 = vshrl.u32 %v299, 7
        %v301 = vsub.s32 %v298, %v300
        %v302 = vrot.slane %v288, %v301
        %v303 = vcombine.high %v295, %v295
        %v304 = vcombine.high %v302, %v302
        %v306 = vunpack.c.l.s4 1983009808
        %v307 = vunpack.c.0.s8 %v306
        %v308 = vlaneseq
        %v309 = vshrl.u32 %v308, 7
        %v310 = vsub.s32 %v307, %v309
        %v311 = vrot.slane %v279, %v310
        %312 = vrot.lane.b32.xlu0 %v295, 18
        %v313 = vpop.permute.xlu0 %312
        %314 = vrot.lane.b32.xlu0 %v303, 18
        %v315 = vpop.permute.xlu0 %314
        %316 = vrot.lane.b32.xlu0 %v302, 18
        %v317 = vpop.permute.xlu0 %316
        %318 = vrot.lane.b32.xlu0 %v304, 18
        %v319 = vpop.permute.xlu0 %318
        %320 = vrot.lane.b32.xlu0 %v311, 18
        %v321 = vpop.permute.xlu0 %320
        %vm322 = vcmask 146432
        %v323 = vsel %vm322, %v313, %v315
        %v324 = vsel %vm322, %v315, %v317
        %v325 = vsel %vm322, %v317, %v319
        %v326 = vsel %vm322, %v319, %v321
        %vm327 = vcmask 31744
        %v329 = vsel %vm327, %v285, 0
        %vm331 = vcmask 1041408
        %v333 = vsel %vm331, %v323, 0
        %v336 = vsel %vm331, %v324, 0
        %v339 = vsel %vm331, %v325, 0
        %v342 = vsel %vm331, %v326, 0
        %344 = vmatprep.subr.bf16.mxu0 %v336
        %345 = vmatpush1.bf16.msra.mxu0 %v333
        %346 = vmatprep.subr.bf16.mxu0 0
        %347 = vmatpush1.bf16.msra.mxu0 0
        %348 = vmatprep.subr.bf16.mxu0 0
        %349 = vmatpush1.bf16.msra.mxu0 0
        %350 = vmatprep.subr.bf16.mxu0 0
        %351 = vmatpush1.bf16.msra.mxu0 0
        %352 = vmatprep.subr.bf16.mxu0 0
        %353 = vmatpush1.bf16.msra.mxu0 0
        %354 = vmatprep.subr.bf16.mxu0 0
        %355 = vmatpush1.bf16.msra.mxu0 0
        %356 = vmatprep.subr.bf16.mxu0 0
        %357 = vmatpush1.bf16.msra.mxu0 0
        %358 = vmatprep.subr.bf16.mxu0 0
        %359 = vmatpush1.bf16.msra.mxu0 0
        %360 = vmatprep.subr.bf16.mxu0 0
        %361 = vmatpush1.bf16.msra.mxu0 0
        %362 = vmatprep.subr.bf16.mxu0 0
        %363 = vmatpush1.bf16.msra.mxu0 0
        %364 = vmatprep.subr.bf16.mxu0 0
        %365 = vmatpush1.bf16.msra.mxu0 0
        %366 = vmatprep.subr.bf16.mxu0 0
        %367 = vmatpush1.bf16.msra.mxu0 0
        %368 = vmatprep.subr.bf16.mxu0 0
        %369 = vmatpush1.bf16.msra.mxu0 0
        %370 = vmatprep.subr.bf16.mxu0 0
        %371 = vmatpush1.bf16.msra.mxu0 0
        %372 = vmatprep.subr.bf16.mxu0 0
        %373 = vmatpush1.bf16.msra.mxu0 0
        %374 = vmatprep.subr.bf16.mxu0 0
        %375 = vmatpush1.bf16.msra.mxu0 0
        %376 = vmatprep.mubr.bf16.mxu0 0
        %377 = vmatmul.mubr.bf16.gmra.mrb[0].mxu0 %v329
        %v378 = vpop.f32.mrb[0].mxu0
        %v379 = vadd.f32 0.0, %v378
        %v380 = vpop.f32.mrb[0].mxu0
        %v381 = vadd.f32 0.0, %v380
        %v382 = vpop.f32.mrb[0].mxu0
        %v383 = vpop.f32.mrb[0].mxu0
        %384 = vdwg.mxu0
        %385 = vmatprep.subr.bf16.mxu0 %v342
        %386 = vmatpush1.bf16.msra.mxu0 %v339
        %387 = vmatprep.subr.bf16.mxu0 0
        %388 = vmatpush1.bf16.msra.mxu0 0
        %389 = vmatprep.subr.bf16.mxu0 0
        %390 = vmatpush1.bf16.msra.mxu0 0
        %391 = vmatprep.subr.bf16.mxu0 0
        %392 = vmatpush1.bf16.msra.mxu0 0
        %393 = vmatprep.subr.bf16.mxu0 0
        %394 = vmatpush1.bf16.msra.mxu0 0
        %395 = vmatprep.subr.bf16.mxu0 0
        %396 = vmatpush1.bf16.msra.mxu0 0
        %397 = vmatprep.subr.bf16.mxu0 0
        %398 = vmatpush1.bf16.msra.mxu0 0
        %399 = vmatprep.subr.bf16.mxu0 0
        %400 = vmatpush1.bf16.msra.mxu0 0
        %401 = vmatprep.subr.bf16.mxu0 0
        %402 = vmatpush1.bf16.msra.mxu0 0
        %403 = vmatprep.subr.bf16.mxu0 0
        %404 = vmatpush1.bf16.msra.mxu0 0
        %405 = vmatprep.subr.bf16.mxu0 0
        %406 = vmatpush1.bf16.msra.mxu0 0
        %407 = vmatprep.subr.bf16.mxu0 0
        %408 = vmatpush1.bf16.msra.mxu0 0
        %409 = vmatprep.subr.bf16.mxu0 0
        %410 = vmatpush1.bf16.msra.mxu0 0
        %411 = vmatprep.subr.bf16.mxu0 0
        %412 = vmatpush1.bf16.msra.mxu0 0
        %413 = vmatprep.subr.bf16.mxu0 0
        %414 = vmatpush1.bf16.msra.mxu0 0
        %415 = vmatprep.subr.bf16.mxu0 0
        %416 = vmatpush1.bf16.msra.mxu0 0
        %417 = vmatprep.mubr.bf16.mxu0 0
        %418 = vmatmul.mubr.bf16.gmra.mrb[0].mxu0 %v329
        %v419 = vpop.f32.mrb[0].mxu0
        %v420 = vadd.f32 0.0, %v419
        %v421 = vpop.f32.mrb[0].mxu0
        %v422 = vadd.f32 0.0, %v421
        %v423 = vpop.f32.mrb[0].mxu0
        %v424 = vpop.f32.mrb[0].mxu0
        %425 = vdwg.mxu0
        %426 = vrot.lane.b32.xlu0 %v295, 19
        %v427 = vpop.permute.xlu0 %426
        %428 = vrot.lane.b32.xlu0 %v303, 19
        %v429 = vpop.permute.xlu0 %428
        %430 = vrot.lane.b32.xlu0 %v302, 19
        %v431 = vpop.permute.xlu0 %430
        %432 = vrot.lane.b32.xlu0 %v304, 19
        %v433 = vpop.permute.xlu0 %432
        %434 = vrot.lane.b32.xlu0 %v311, 19
        %v435 = vpop.permute.xlu0 %434
        %vm436 = vcmask 154624
        %v437 = vsel %vm436, %v427, %v429
        %v438 = vsel %vm436, %v429, %v431
        %v439 = vsel %vm436, %v431, %v433
        %v440 = vsel %vm436, %v433, %v435
        %v442 = vsel %vm327, %v280, 0
        %v445 = vsel %vm331, %v437, 0
        %v448 = vsel %vm331, %v438, 0
        %v451 = vsel %vm331, %v439, 0
        %v454 = vsel %vm331, %v440, 0
        %456 = vmatprep.subr.bf16.mxu0 %v448
        %457 = vmatpush1.bf16.msra.mxu0 %v445
        %458 = vmatprep.subr.bf16.mxu0 0
        %459 = vmatpush1.bf16.msra.mxu0 0
        %460 = vmatprep.subr.bf16.mxu0 0
        %461 = vmatpush1.bf16.msra.mxu0 0
        %462 = vmatprep.subr.bf16.mxu0 0
        %463 = vmatpush1.bf16.msra.mxu0 0
        %464 = vmatprep.subr.bf16.mxu0 0
        %465 = vmatpush1.bf16.msra.mxu0 0
        %466 = vmatprep.subr.bf16.mxu0 0
        %467 = vmatpush1.bf16.msra.mxu0 0
        %468 = vmatprep.subr.bf16.mxu0 0
        %469 = vmatpush1.bf16.msra.mxu0 0
        %470 = vmatprep.subr.bf16.mxu0 0
        %471 = vmatpush1.bf16.msra.mxu0 0
        %472 = vmatprep.subr.bf16.mxu0 0
        %473 = vmatpush1.bf16.msra.mxu0 0
        %474 = vmatprep.subr.bf16.mxu0 0
        %475 = vmatpush1.bf16.msra.mxu0 0
        %476 = vmatprep.subr.bf16.mxu0 0
        %477 = vmatpush1.bf16.msra.mxu0 0
        %478 = vmatprep.subr.bf16.mxu0 0
        %479 = vmatpush1.bf16.msra.mxu0 0
        %480 = vmatprep.subr.bf16.mxu0 0
        %481 = vmatpush1.bf16.msra.mxu0 0
        %482 = vmatprep.subr.bf16.mxu0 0
        %483 = vmatpush1.bf16.msra.mxu0 0
        %484 = vmatprep.subr.bf16.mxu0 0
        %485 = vmatpush1.bf16.msra.mxu0 0
        %486 = vmatprep.subr.bf16.mxu0 0
        %487 = vmatpush1.bf16.msra.mxu0 0
        %488 = vmatprep.mubr.bf16.mxu0 0
        %489 = vmatmul.mubr.bf16.gmra.mrb[0].mxu0 %v442
        %v490 = vpop.f32.mrb[0].mxu0
        %v491 = vadd.f32 %v379, %v490
        %v492 = vpop.f32.mrb[0].mxu0
        %v493 = vadd.f32 %v381, %v492
        %v494 = vpop.f32.mrb[0].mxu0
        %v495 = vpop.f32.mrb[0].mxu0
        %496 = vdwg.mxu0
        %497 = vmatprep.subr.bf16.mxu0 %v454
        %498 = vmatpush1.bf16.msra.mxu0 %v451
        %499 = vmatprep.subr.bf16.mxu0 0
        %500 = vmatpush1.bf16.msra.mxu0 0
        %501 = vmatprep.subr.bf16.mxu0 0
        %502 = vmatpush1.bf16.msra.mxu0 0
        %503 = vmatprep.subr.bf16.mxu0 0
        %504 = vmatpush1.bf16.msra.mxu0 0
        %505 = vmatprep.subr.bf16.mxu0 0
        %506 = vmatpush1.bf16.msra.mxu0 0
        %507 = vmatprep.subr.bf16.mxu0 0
        %508 = vmatpush1.bf16.msra.mxu0 0
        %509 = vmatprep.subr.bf16.mxu0 0
        %510 = vmatpush1.bf16.msra.mxu0 0
        %511 = vmatprep.subr.bf16.mxu0 0
        %512 = vmatpush1.bf16.msra.mxu0 0
        %513 = vmatprep.subr.bf16.mxu0 0
        %514 = vmatpush1.bf16.msra.mxu0 0
        %515 = vmatprep.subr.bf16.mxu0 0
        %516 = vmatpush1.bf16.msra.mxu0 0
        %517 = vmatprep.subr.bf16.mxu0 0
        %518 = vmatpush1.bf16.msra.mxu0 0
        %519 = vmatprep.subr.bf16.mxu0 0
        %520 = vmatpush1.bf16.msra.mxu0 0
        %521 = vmatprep.subr.bf16.mxu0 0
        %522 = vmatpush1.bf16.msra.mxu0 0
        %523 = vmatprep.subr.bf16.mxu0 0
        %524 = vmatpush1.bf16.msra.mxu0 0
        %525 = vmatprep.subr.bf16.mxu0 0
        %526 = vmatpush1.bf16.msra.mxu0 0
        %527 = vmatprep.subr.bf16.mxu0 0
        %528 = vmatpush1.bf16.msra.mxu0 0
        %529 = vmatprep.mubr.bf16.mxu0 0
        %530 = vmatmul.mubr.bf16.gmra.mrb[0].mxu0 %v442
        %v531 = vpop.f32.mrb[0].mxu0
        %v532 = vadd.f32 %v420, %v531
        %v533 = vpop.f32.mrb[0].mxu0
        %v534 = vadd.f32 %v422, %v533
        %v535 = vpop.f32.mrb[0].mxu0
        %v536 = vpop.f32.mrb[0].mxu0
        %537 = vdwg.mxu0
        %538 = vrot.lane.b32.xlu0 %v283, 120
        %v539 = vpop.permute.xlu0 %538
        %540 = vrot.lane.b32.xlu0 %v295, 17
        %v541 = vpop.permute.xlu0 %540
        %542 = vrot.lane.b32.xlu0 %v303, 17
        %v543 = vpop.permute.xlu0 %542
        %544 = vrot.lane.b32.xlu0 %v302, 17
        %v545 = vpop.permute.xlu0 %544
        %546 = vrot.lane.b32.xlu0 %v304, 17
        %v547 = vpop.permute.xlu0 %546
        %548 = vrot.lane.b32.xlu0 %v311, 17
        %v549 = vpop.permute.xlu0 %548
        %vm550 = vcmask 138240
        %v551 = vsel %vm550, %v541, %v543
        %v552 = vsel %vm550, %v543, %v545
        %v553 = vsel %vm550, %v545, %v547
        %v554 = vsel %vm550, %v547, %v549
        %v556 = vsel %vm327, %v539, 0
        %v559 = vsel %vm331, %v551, 0
        %v562 = vsel %vm331, %v552, 0
        %v565 = vsel %vm331, %v553, 0
        %v568 = vsel %vm331, %v554, 0
        %570 = vmatprep.subr.bf16.mxu0 %v562
        %571 = vmatpush1.bf16.msra.mxu0 %v559
        %572 = vmatprep.subr.bf16.mxu0 0
        %573 = vmatpush1.bf16.msra.mxu0 0
        %574 = vmatprep.subr.bf16.mxu0 0
        %575 = vmatpush1.bf16.msra.mxu0 0
        %576 = vmatprep.subr.bf16.mxu0 0
        %577 = vmatpush1.bf16.msra.mxu0 0
        %578 = vmatprep.subr.bf16.mxu0 0
        %579 = vmatpush1.bf16.msra.mxu0 0
        %580 = vmatprep.subr.bf16.mxu0 0
        %581 = vmatpush1.bf16.msra.mxu0 0
        %582 = vmatprep.subr.bf16.mxu0 0
        %583 = vmatpush1.bf16.msra.mxu0 0
        %584 = vmatprep.subr.bf16.mxu0 0
        %585 = vmatpush1.bf16.msra.mxu0 0
        %586 = vmatprep.subr.bf16.mxu0 0
        %587 = vmatpush1.bf16.msra.mxu0 0
        %588 = vmatprep.subr.bf16.mxu0 0
        %589 = vmatpush1.bf16.msra.mxu0 0
        %590 = vmatprep.subr.bf16.mxu0 0
        %591 = vmatpush1.bf16.msra.mxu0 0
        %592 = vmatprep.subr.bf16.mxu0 0
        %593 = vmatpush1.bf16.msra.mxu0 0
        %594 = vmatprep.subr.bf16.mxu0 0
        %595 = vmatpush1.bf16.msra.mxu0 0
        %596 = vmatprep.subr.bf16.mxu0 0
        %597 = vmatpush1.bf16.msra.mxu0 0
        %598 = vmatprep.subr.bf16.mxu0 0
        %599 = vmatpush1.bf16.msra.mxu0 0
        %600 = vmatprep.subr.bf16.mxu0 0
        %601 = vmatpush1.bf16.msra.mxu0 0
        %602 = vmatprep.mubr.bf16.mxu0 0
        %603 = vmatmul.mubr.bf16.gmra.mrb[0].mxu0 %v556
        %v604 = vpop.f32.mrb[0].mxu0
        %v605 = vadd.f32 0.0, %v604
        %v606 = vpop.f32.mrb[0].mxu0
        %v607 = vadd.f32 0.0, %v606
        %v608 = vpop.f32.mrb[0].mxu0
        %v609 = vpop.f32.mrb[0].mxu0
        %610 = vdwg.mxu0
        %611 = vmatprep.subr.bf16.mxu0 %v568
        %612 = vmatpush1.bf16.msra.mxu0 %v565
        %613 = vmatprep.subr.bf16.mxu0 0
        %614 = vmatpush1.bf16.msra.mxu0 0
        %615 = vmatprep.subr.bf16.mxu0 0
        %616 = vmatpush1.bf16.msra.mxu0 0
        %617 = vmatprep.subr.bf16.mxu0 0
        %618 = vmatpush1.bf16.msra.mxu0 0
        %619 = vmatprep.subr.bf16.mxu0 0
        %620 = vmatpush1.bf16.msra.mxu0 0
        %621 = vmatprep.subr.bf16.mxu0 0
        %622 = vmatpush1.bf16.msra.mxu0 0
        %623 = vmatprep.subr.bf16.mxu0 0
        %624 = vmatpush1.bf16.msra.mxu0 0
        %625 = vmatprep.subr.bf16.mxu0 0
        %626 = vmatpush1.bf16.msra.mxu0 0
        %627 = vmatprep.subr.bf16.mxu0 0
        %628 = vmatpush1.bf16.msra.mxu0 0
        %629 = vmatprep.subr.bf16.mxu0 0
        %630 = vmatpush1.bf16.msra.mxu0 0
        %631 = vmatprep.subr.bf16.mxu0 0
        %632 = vmatpush1.bf16.msra.mxu0 0
        %633 = vmatprep.subr.bf16.mxu0 0
        %634 = vmatpush1.bf16.msra.mxu0 0
        %635 = vmatprep.subr.bf16.mxu0 0
        %636 = vmatpush1.bf16.msra.mxu0 0
        %637 = vmatprep.subr.bf16.mxu0 0
        %638 = vmatpush1.bf16.msra.mxu0 0
        %639 = vmatprep.subr.bf16.mxu0 0
        %640 = vmatpush1.bf16.msra.mxu0 0
        %641 = vmatprep.subr.bf16.mxu0 0
        %642 = vmatpush1.bf16.msra.mxu0 0
        %643 = vmatprep.mubr.bf16.mxu0 0
        %644 = vmatmul.mubr.bf16.gmra.mrb[0].mxu0 %v556
        %v645 = vpop.f32.mrb[0].mxu0
        %v646 = vadd.f32 0.0, %v645
        %v647 = vpop.f32.mrb[0].mxu0
        %v648 = vadd.f32 0.0, %v647
        %v649 = vpop.f32.mrb[0].mxu0
        %v650 = vpop.f32.mrb[0].mxu0
        %651 = vdwg.mxu0
        %v652 = vadd.f32 %v491, %v605
        %v653 = vadd.f32 %v493, %v607
        %v654 = vadd.f32 %v532, %v646
        %v655 = vadd.f32 %v534, %v648
        %656 = vrot.lane.b32.xlu0 %v283, 116
        %v657 = vpop.permute.xlu0 %656
        %658 = vrot.lane.b32.xlu0 %v295, 1
        %v659 = vpop.permute.xlu0 %658
        %660 = vrot.lane.b32.xlu0 %v303, 1
        %v661 = vpop.permute.xlu0 %660
        %662 = vrot.lane.b32.xlu0 %v302, 1
        %v663 = vpop.permute.xlu0 %662
        %664 = vrot.lane.b32.xlu0 %v304, 1
        %v665 = vpop.permute.xlu0 %664
        %666 = vrot.lane.b32.xlu0 %v311, 1
        %v667 = vpop.permute.xlu0 %666
        %vm668 = vcmask 7168
        %v669 = vsel %vm668, %v659, %v661
        %v670 = vsel %vm668, %v661, %v663
        %v671 = vsel %vm668, %v663, %v665
        %v672 = vsel %vm668, %v665, %v667
        %v674 = vsel %vm327, %v657, 0
        %v677 = vsel %vm331, %v669, 0
        %v680 = vsel %vm331, %v670, 0
        %v683 = vsel %vm331, %v671, 0
        %v686 = vsel %vm331, %v672, 0
        %688 = vmatprep.subr.bf16.mxu0 %v680
        %689 = vmatpush1.bf16.msra.mxu0 %v677
        %690 = vmatprep.subr.bf16.mxu0 0
        %691 = vmatpush1.bf16.msra.mxu0 0
        %692 = vmatprep.subr.bf16.mxu0 0
        %693 = vmatpush1.bf16.msra.mxu0 0
        %694 = vmatprep.subr.bf16.mxu0 0
        %695 = vmatpush1.bf16.msra.mxu0 0
        %696 = vmatprep.subr.bf16.mxu0 0
        %697 = vmatpush1.bf16.msra.mxu0 0
        %698 = vmatprep.subr.bf16.mxu0 0
        %699 = vmatpush1.bf16.msra.mxu0 0
        %700 = vmatprep.subr.bf16.mxu0 0
        %701 = vmatpush1.bf16.msra.mxu0 0
        %702 = vmatprep.subr.bf16.mxu0 0
        %703 = vmatpush1.bf16.msra.mxu0 0
        %704 = vmatprep.subr.bf16.mxu0 0
        %705 = vmatpush1.bf16.msra.mxu0 0
        %706 = vmatprep.subr.bf16.mxu0 0
        %707 = vmatpush1.bf16.msra.mxu0 0
        %708 = vmatprep.subr.bf16.mxu0 0
        %709 = vmatpush1.bf16.msra.mxu0 0
        %710 = vmatprep.subr.bf16.mxu0 0
        %711 = vmatpush1.bf16.msra.mxu0 0
        %712 = vmatprep.subr.bf16.mxu0 0
        %713 = vmatpush1.bf16.msra.mxu0 0
        %714 = vmatprep.subr.bf16.mxu0 0
        %715 = vmatpush1.bf16.msra.mxu0 0
        %716 = vmatprep.subr.bf16.mxu0 0
        %717 = vmatpush1.bf16.msra.mxu0 0
        %718 = vmatprep.subr.bf16.mxu0 0
        %719 = vmatpush1.bf16.msra.mxu0 0
        %720 = vmatprep.mubr.bf16.mxu0 0
        %721 = vmatmul.mubr.bf16.gmra.mrb[0].mxu0 %v674
        %v722 = vpop.f32.mrb[0].mxu0
        %v723 = vadd.f32 0.0, %v722
        %v724 = vpop.f32.mrb[0].mxu0
        %v725 = vadd.f32 0.0, %v724
        %v726 = vpop.f32.mrb[0].mxu0
        %v727 = vpop.f32.mrb[0].mxu0
        %728 = vdwg.mxu0
        %729 = vmatprep.subr.bf16.mxu0 %v686
        %730 = vmatpush1.bf16.msra.mxu0 %v683
        %731 = vmatprep.subr.bf16.mxu0 0
        %732 = vmatpush1.bf16.msra.mxu0 0
        %733 = vmatprep.subr.bf16.mxu0 0
        %734 = vmatpush1.bf16.msra.mxu0 0
        %735 = vmatprep.subr.bf16.mxu0 0
        %736 = vmatpush1.bf16.msra.mxu0 0
        %737 = vmatprep.subr.bf16.mxu0 0
        %738 = vmatpush1.bf16.msra.mxu0 0
        %739 = vmatprep.subr.bf16.mxu0 0
        %740 = vmatpush1.bf16.msra.mxu0 0
        %741 = vmatprep.subr.bf16.mxu0 0
        %742 = vmatpush1.bf16.msra.mxu0 0
        %743 = vmatprep.subr.bf16.mxu0 0
        %744 = vmatpush1.bf16.msra.mxu0 0
        %745 = vmatprep.subr.bf16.mxu0 0
        %746 = vmatpush1.bf16.msra.mxu0 0
        %747 = vmatprep.subr.bf16.mxu0 0
        %748 = vmatpush1.bf16.msra.mxu0 0
        %749 = vmatprep.subr.bf16.mxu0 0
        %750 = vmatpush1.bf16.msra.mxu0 0
        %751 = vmatprep.subr.bf16.mxu0 0
        %752 = vmatpush1.bf16.msra.mxu0 0
        %753 = vmatprep.subr.bf16.mxu0 0
        %754 = vmatpush1.bf16.msra.mxu0 0
        %755 = vmatprep.subr.bf16.mxu0 0
        %756 = vmatpush1.bf16.msra.mxu0 0
        %757 = vmatprep.subr.bf16.mxu0 0
        %758 = vmatpush1.bf16.msra.mxu0 0
        %759 = vmatprep.subr.bf16.mxu0 0
        %760 = vmatpush1.bf16.msra.mxu0 0
        %761 = vmatprep.mubr.bf16.mxu0 0
        %762 = vmatmul.mubr.bf16.gmra.mrb[0].mxu0 %v674
        %v763 = vpop.f32.mrb[0].mxu0
        %v764 = vadd.f32 0.0, %v763
        %v765 = vpop.f32.mrb[0].mxu0
        %v766 = vadd.f32 0.0, %v765
        %v767 = vpop.f32.mrb[0].mxu0
        %v768 = vpop.f32.mrb[0].mxu0
        %769 = vdwg.mxu0
        %v770 = vadd.f32 %v652, %v723
        %v771 = vadd.f32 %v653, %v725
        %v772 = vadd.f32 %v654, %v764
        %v773 = vadd.f32 %v655, %v766
        %774 = vrot.lane.b32.xlu0 %v283, 112
        %v775 = vpop.permute.xlu0 %774
        %v777 = vsel %vm327, %v775, 0
        %v780 = vsel %vm331, %v303, 0
        %v783 = vsel %vm331, %v302, 0
        %v786 = vsel %vm331, %v304, 0
        %v789 = vsel %vm331, %v311, 0
        %791 = vmatprep.subr.bf16.mxu0 %v783
        %792 = vmatpush1.bf16.msra.mxu0 %v780
        %793 = vmatprep.subr.bf16.mxu0 0
        %794 = vmatpush1.bf16.msra.mxu0 0
        %795 = vmatprep.subr.bf16.mxu0 0
        %796 = vmatpush1.bf16.msra.mxu0 0
        %797 = vmatprep.subr.bf16.mxu0 0
        %798 = vmatpush1.bf16.msra.mxu0 0
        %799 = vmatprep.subr.bf16.mxu0 0
        %800 = vmatpush1.bf16.msra.mxu0 0
        %801 = vmatprep.subr.bf16.mxu0 0
        %802 = vmatpush1.bf16.msra.mxu0 0
        %803 = vmatprep.subr.bf16.mxu0 0
        %804 = vmatpush1.bf16.msra.mxu0 0
        %805 = vmatprep.subr.bf16.mxu0 0
        %806 = vmatpush1.bf16.msra.mxu0 0
        %807 = vmatprep.subr.bf16.mxu0 0
        %808 = vmatpush1.bf16.msra.mxu0 0
        %809 = vmatprep.subr.bf16.mxu0 0
        %810 = vmatpush1.bf16.msra.mxu0 0
        %811 = vmatprep.subr.bf16.mxu0 0
        %812 = vmatpush1.bf16.msra.mxu0 0
        %813 = vmatprep.subr.bf16.mxu0 0
        %814 = vmatpush1.bf16.msra.mxu0 0
        %815 = vmatprep.subr.bf16.mxu0 0
        %816 = vmatpush1.bf16.msra.mxu0 0
        %817 = vmatprep.subr.bf16.mxu0 0
        %818 = vmatpush1.bf16.msra.mxu0 0
        %819 = vmatprep.subr.bf16.mxu0 0
        %820 = vmatpush1.bf16.msra.mxu0 0
        %821 = vmatprep.subr.bf16.mxu0 0
        %822 = vmatpush1.bf16.msra.mxu0 0
        %823 = vmatprep.mubr.bf16.mxu0 0
        %824 = vmatmul.mubr.bf16.gmra.mrb[0].mxu0 %v777
        %v825 = vpop.f32.mrb[0].mxu0
        %v826 = vadd.f32 0.0, %v825
        %v827 = vpop.f32.mrb[0].mxu0
        %v828 = vadd.f32 0.0, %v827
        %v829 = vpop.f32.mrb[0].mxu0
        %v830 = vpop.f32.mrb[0].mxu0
        %831 = vdwg.mxu0
        %832 = vmatprep.subr.bf16.mxu0 %v789
        %833 = vmatpush1.bf16.msra.mxu0 %v786
        %834 = vmatprep.subr.bf16.mxu0 0
        %835 = vmatpush1.bf16.msra.mxu0 0
        %836 = vmatprep.subr.bf16.mxu0 0
        %837 = vmatpush1.bf16.msra.mxu0 0
        %838 = vmatprep.subr.bf16.mxu0 0
        %839 = vmatpush1.bf16.msra.mxu0 0
        %840 = vmatprep.subr.bf16.mxu0 0
        %841 = vmatpush1.bf16.msra.mxu0 0
        %842 = vmatprep.subr.bf16.mxu0 0
        %843 = vmatpush1.bf16.msra.mxu0 0
        %844 = vmatprep.subr.bf16.mxu0 0
        %845 = vmatpush1.bf16.msra.mxu0 0
        %846 = vmatprep.subr.bf16.mxu0 0
        %847 = vmatpush1.bf16.msra.mxu0 0
        %848 = vmatprep.subr.bf16.mxu0 0
        %849 = vmatpush1.bf16.msra.mxu0 0
        %850 = vmatprep.subr.bf16.mxu0 0
        %851 = vmatpush1.bf16.msra.mxu0 0
        %852 = vmatprep.subr.bf16.mxu0 0
        %853 = vmatpush1.bf16.msra.mxu0 0
        %854 = vmatprep.subr.bf16.mxu0 0
        %855 = vmatpush1.bf16.msra.mxu0 0
        %856 = vmatprep.subr.bf16.mxu0 0
        %857 = vmatpush1.bf16.msra.mxu0 0
        %858 = vmatprep.subr.bf16.mxu0 0
        %859 = vmatpush1.bf16.msra.mxu0 0
        %860 = vmatprep.subr.bf16.mxu0 0
        %861 = vmatpush1.bf16.msra.mxu0 0
        %862 = vmatprep.subr.bf16.mxu0 0
        %863 = vmatpush1.bf16.msra.mxu0 0
        %864 = vmatprep.mubr.bf16.mxu0 0
        %865 = vmatmul.mubr.bf16.gmra.mrb[0].mxu0 %v777
        %v866 = vpop.f32.mrb[0].mxu0
        %v867 = vadd.f32 0.0, %v866
        %v868 = vpop.f32.mrb[0].mxu0
        %v869 = vadd.f32 0.0, %v868
        %v870 = vpop.f32.mrb[0].mxu0
        %v871 = vpop.f32.mrb[0].mxu0
        %872 = vdwg.mxu0
        %v873 = vadd.f32 %v770, %v826
        %v874 = vadd.f32 %v771, %v828
        %v875 = vadd.f32 %v772, %v867
        %v876 = vadd.f32 %v773, %v869
        %877 = vrot.lane.b32.xlu0 %v283, 108
        %v878 = vpop.permute.xlu0 %877
        %v879 = vcombine.high %v311, %v311
        %880 = vrot.lane.b32.xlu0 %v303, 127
        %v881 = vpop.permute.xlu0 %880
        %882 = vrot.lane.b32.xlu0 %v302, 127
        %v883 = vpop.permute.xlu0 %882
        %884 = vrot.lane.b32.xlu0 %v304, 127
        %v885 = vpop.permute.xlu0 %884
        %886 = vrot.lane.b32.xlu0 %v311, 127
        %v887 = vpop.permute.xlu0 %886
        %888 = vrot.lane.b32.xlu0 %v879, 127
        %v889 = vpop.permute.xlu0 %888
        %vm890 = vcmask 1039360
        %v891 = vsel %vm890, %v881, %v883
        %v892 = vsel %vm890, %v883, %v885
        %v893 = vsel %vm890, %v885, %v887
        %v894 = vsel %vm890, %v887, %v889
        %v896 = vsel %vm327, %v878, 0
        %v899 = vsel %vm331, %v891, 0
        %v902 = vsel %vm331, %v892, 0
        %v905 = vsel %vm331, %v893, 0
        %v908 = vsel %vm331, %v894, 0
        %910 = vmatprep.subr.bf16.mxu0 %v902
        %911 = vmatpush1.bf16.msra.mxu0 %v899
        %912 = vmatprep.subr.bf16.mxu0 0
        %913 = vmatpush1.bf16.msra.mxu0 0
        %914 = vmatprep.subr.bf16.mxu0 0
        %915 = vmatpush1.bf16.msra.mxu0 0
        %916 = vmatprep.subr.bf16.mxu0 0
        %917 = vmatpush1.bf16.msra.mxu0 0
        %918 = vmatprep.subr.bf16.mxu0 0
        %919 = vmatpush1.bf16.msra.mxu0 0
        %920 = vmatprep.subr.bf16.mxu0 0
        %921 = vmatpush1.bf16.msra.mxu0 0
        %922 = vmatprep.subr.bf16.mxu0 0
        %923 = vmatpush1.bf16.msra.mxu0 0
        %924 = vmatprep.subr.bf16.mxu0 0
        %925 = vmatpush1.bf16.msra.mxu0 0
        %926 = vmatprep.subr.bf16.mxu0 0
        %927 = vmatpush1.bf16.msra.mxu0 0
        %928 = vmatprep.subr.bf16.mxu0 0
        %929 = vmatpush1.bf16.msra.mxu0 0
        %930 = vmatprep.subr.bf16.mxu0 0
        %931 = vmatpush1.bf16.msra.mxu0 0
        %932 = vmatprep.subr.bf16.mxu0 0
        %933 = vmatpush1.bf16.msra.mxu0 0
        %934 = vmatprep.subr.bf16.mxu0 0
        %935 = vmatpush1.bf16.msra.mxu0 0
        %936 = vmatprep.subr.bf16.mxu0 0
        %937 = vmatpush1.bf16.msra.mxu0 0
        %938 = vmatprep.subr.bf16.mxu0 0
        %939 = vmatpush1.bf16.msra.mxu0 0
        %940 = vmatprep.subr.bf16.mxu0 0
        %941 = vmatpush1.bf16.msra.mxu0 0
        %942 = vmatprep.mubr.bf16.mxu0 0
        %943 = vmatmul.mubr.bf16.gmra.mrb[0].mxu0 %v896
        %v944 = vpop.f32.mrb[0].mxu0
        %v945 = vadd.f32 0.0, %v944
        %v946 = vpop.f32.mrb[0].mxu0
        %v947 = vadd.f32 0.0, %v946
        %v948 = vpop.f32.mrb[0].mxu0
        %v949 = vpop.f32.mrb[0].mxu0
        %950 = vdwg.mxu0
        %951 = vmatprep.subr.bf16.mxu0 %v908
        %952 = vmatpush1.bf16.msra.mxu0 %v905
        %953 = vmatprep.subr.bf16.mxu0 0
        %954 = vmatpush1.bf16.msra.mxu0 0
        %955 = vmatprep.subr.bf16.mxu0 0
        %956 = vmatpush1.bf16.msra.mxu0 0
        %957 = vmatprep.subr.bf16.mxu0 0
        %958 = vmatpush1.bf16.msra.mxu0 0
        %959 = vmatprep.subr.bf16.mxu0 0
        %960 = vmatpush1.bf16.msra.mxu0 0
        %961 = vmatprep.subr.bf16.mxu0 0
        %962 = vmatpush1.bf16.msra.mxu0 0
        %963 = vmatprep.subr.bf16.mxu0 0
        %964 = vmatpush1.bf16.msra.mxu0 0
        %965 = vmatprep.subr.bf16.mxu0 0
        %966 = vmatpush1.bf16.msra.mxu0 0
        %967 = vmatprep.subr.bf16.mxu0 0
        %968 = vmatpush1.bf16.msra.mxu0 0
        %969 = vmatprep.subr.bf16.mxu0 0
        %970 = vmatpush1.bf16.msra.mxu0 0
        %971 = vmatprep.subr.bf16.mxu0 0
        %972 = vmatpush1.bf16.msra.mxu0 0
        %973 = vmatprep.subr.bf16.mxu0 0
        %974 = vmatpush1.bf16.msra.mxu0 0
        %975 = vmatprep.subr.bf16.mxu0 0
        %976 = vmatpush1.bf16.msra.mxu0 0
        %977 = vmatprep.subr.bf16.mxu0 0
        %978 = vmatpush1.bf16.msra.mxu0 0
        %979 = vmatprep.subr.bf16.mxu0 0
        %980 = vmatpush1.bf16.msra.mxu0 0
        %981 = vmatprep.subr.bf16.mxu0 0
        %982 = vmatpush1.bf16.msra.mxu0 0
        %983 = vmatprep.mubr.bf16.mxu0 0
        %984 = vmatmul.mubr.bf16.gmra.mrb[0].mxu0 %v896
        %v985 = vpop.f32.mrb[0].mxu0
        %v986 = vadd.f32 0.0, %v985
        %v987 = vpop.f32.mrb[0].mxu0
        %v988 = vadd.f32 0.0, %v987
        %v989 = vpop.f32.mrb[0].mxu0
        %v990 = vpop.f32.mrb[0].mxu0
        %991 = vdwg.mxu0
        %v992 = vadd.f32 %v873, %v945
        %v993 = vadd.f32 %v874, %v947
        %v994 = vadd.f32 %v875, %v986
        %v995 = vadd.f32 %v876, %v988
        %996 = vrot.lane.b32.xlu0 %v283, 104
        %v997 = vpop.permute.xlu0 %996
        %998 = vrot.lane.b32.xlu0 %v303, 111
        %v999 = vpop.permute.xlu0 %998
        %1000 = vrot.lane.b32.xlu0 %v302, 111
        %v1001 = vpop.permute.xlu0 %1000
        %1002 = vrot.lane.b32.xlu0 %v304, 111
        %v1003 = vpop.permute.xlu0 %1002
        %1004 = vrot.lane.b32.xlu0 %v311, 111
        %v1005 = vpop.permute.xlu0 %1004
        %1006 = vrot.lane.b32.xlu0 %v879, 111
        %v1007 = vpop.permute.xlu0 %1006
        %vm1008 = vcmask 908288
        %v1009 = vsel %vm1008, %v999, %v1001
        %v1010 = vsel %vm1008, %v1001, %v1003
        %v1011 = vsel %vm1008, %v1003, %v1005
        %v1012 = vsel %vm1008, %v1005, %v1007
        %v1014 = vsel %vm327, %v997, 0
        %v1017 = vsel %vm331, %v1009, 0
        %v1020 = vsel %vm331, %v1010, 0
        %v1023 = vsel %vm331, %v1011, 0
        %v1026 = vsel %vm331, %v1012, 0
        %1028 = vmatprep.subr.bf16.mxu0 %v1020
        %1029 = vmatpush1.bf16.msra.mxu0 %v1017
        %1030 = vmatprep.subr.bf16.mxu0 0
        %1031 = vmatpush1.bf16.msra.mxu0 0
        %1032 = vmatprep.subr.bf16.mxu0 0
        %1033 = vmatpush1.bf16.msra.mxu0 0
        %1034 = vmatprep.subr.bf16.mxu0 0
        %1035 = vmatpush1.bf16.msra.mxu0 0
        %1036 = vmatprep.subr.bf16.mxu0 0
        %1037 = vmatpush1.bf16.msra.mxu0 0
        %1038 = vmatprep.subr.bf16.mxu0 0
        %1039 = vmatpush1.bf16.msra.mxu0 0
        %1040 = vmatprep.subr.bf16.mxu0 0
        %1041 = vmatpush1.bf16.msra.mxu0 0
        %1042 = vmatprep.subr.bf16.mxu0 0
        %1043 = vmatpush1.bf16.msra.mxu0 0
        %1044 = vmatprep.subr.bf16.mxu0 0
        %1045 = vmatpush1.bf16.msra.mxu0 0
        %1046 = vmatprep.subr.bf16.mxu0 0
        %1047 = vmatpush1.bf16.msra.mxu0 0
        %1048 = vmatprep.subr.bf16.mxu0 0
        %1049 = vmatpush1.bf16.msra.mxu0 0
        %1050 = vmatprep.subr.bf16.mxu0 0
        %1051 = vmatpush1.bf16.msra.mxu0 0
        %1052 = vmatprep.subr.bf16.mxu0 0
        %1053 = vmatpush1.bf16.msra.mxu0 0
        %1054 = vmatprep.subr.bf16.mxu0 0
        %1055 = vmatpush1.bf16.msra.mxu0 0
        %1056 = vmatprep.subr.bf16.mxu0 0
        %1057 = vmatpush1.bf16.msra.mxu0 0
        %1058 = vmatprep.subr.bf16.mxu0 0
        %1059 = vmatpush1.bf16.msra.mxu0 0
        %1060 = vmatprep.mubr.bf16.mxu0 0
        %1061 = vmatmul.mubr.bf16.gmra.mrb[0].mxu0 %v1014
        %v1062 = vpop.f32.mrb[0].mxu0
        %v1063 = vadd.f32 0.0, %v1062
        %v1064 = vpop.f32.mrb[0].mxu0
        %v1065 = vadd.f32 0.0, %v1064
        %v1066 = vpop.f32.mrb[0].mxu0
        %v1067 = vpop.f32.mrb[0].mxu0
        %1068 = vdwg.mxu0
        %1069 = vmatprep.subr.bf16.mxu0 %v1026
        %1070 = vmatpush1.bf16.msra.mxu0 %v1023
        %1071 = vmatprep.subr.bf16.mxu0 0
        %1072 = vmatpush1.bf16.msra.mxu0 0
        %1073 = vmatprep.subr.bf16.mxu0 0
        %1074 = vmatpush1.bf16.msra.mxu0 0
        %1075 = vmatprep.subr.bf16.mxu0 0
        %1076 = vmatpush1.bf16.msra.mxu0 0
        %1077 = vmatprep.subr.bf16.mxu0 0
        %1078 = vmatpush1.bf16.msra.mxu0 0
        %1079 = vmatprep.subr.bf16.mxu0 0
        %1080 = vmatpush1.bf16.msra.mxu0 0
        %1081 = vmatprep.subr.bf16.mxu0 0
        %1082 = vmatpush1.bf16.msra.mxu0 0
        %1083 = vmatprep.subr.bf16.mxu0 0
        %1084 = vmatpush1.bf16.msra.mxu0 0
        %1085 = vmatprep.subr.bf16.mxu0 0
        %1086 = vmatpush1.bf16.msra.mxu0 0
        %1087 = vmatprep.subr.bf16.mxu0 0
        %1088 = vmatpush1.bf16.msra.mxu0 0
        %1089 = vmatprep.subr.bf16.mxu0 0
        %1090 = vmatpush1.bf16.msra.mxu0 0
        %1091 = vmatprep.subr.bf16.mxu0 0
        %1092 = vmatpush1.bf16.msra.mxu0 0
        %1093 = vmatprep.subr.bf16.mxu0 0
        %1094 = vmatpush1.bf16.msra.mxu0 0
        %1095 = vmatprep.subr.bf16.mxu0 0
        %1096 = vmatpush1.bf16.msra.mxu0 0
        %1097 = vmatprep.subr.bf16.mxu0 0
        %1098 = vmatpush1.bf16.msra.mxu0 0
        %1099 = vmatprep.subr.bf16.mxu0 0
        %1100 = vmatpush1.bf16.msra.mxu0 0
        %1101 = vmatprep.mubr.bf16.mxu0 0
        %1102 = vmatmul.mubr.bf16.gmra.mrb[0].mxu0 %v1014
        %v1103 = vpop.f32.mrb[0].mxu0
        %v1104 = vadd.f32 0.0, %v1103
        %v1105 = vpop.f32.mrb[0].mxu0
        %v1106 = vadd.f32 0.0, %v1105
        %v1107 = vpop.f32.mrb[0].mxu0
        %v1108 = vpop.f32.mrb[0].mxu0
        %1109 = vdwg.mxu0
        %v1110 = vadd.f32 %v992, %v1063
        %v1111 = vadd.f32 %v993, %v1065
        %v1112 = vadd.f32 %v994, %v1104
        %v1113 = vadd.f32 %v995, %v1106
        %1114 = vrot.lane.b32.xlu0 %v283, 100
        %v1115 = vpop.permute.xlu0 %1114
        %1116 = vrot.lane.b32.xlu0 %v303, 110
        %v1117 = vpop.permute.xlu0 %1116
        %1118 = vrot.lane.b32.xlu0 %v302, 110
        %v1119 = vpop.permute.xlu0 %1118
        %1120 = vrot.lane.b32.xlu0 %v304, 110
        %v1121 = vpop.permute.xlu0 %1120
        %1122 = vrot.lane.b32.xlu0 %v311, 110
        %v1123 = vpop.permute.xlu0 %1122
        %1124 = vrot.lane.b32.xlu0 %v879, 110
        %v1125 = vpop.permute.xlu0 %1124
        %vm1126 = vcmask 900096
        %v1127 = vsel %vm1126, %v1117, %v1119
        %v1128 = vsel %vm1126, %v1119, %v1121
        %v1129 = vsel %vm1126, %v1121, %v1123
        %v1130 = vsel %vm1126, %v1123, %v1125
        %v1132 = vsel %vm327, %v1115, 0
        %v1135 = vsel %vm331, %v1127, 0
        %v1138 = vsel %vm331, %v1128, 0
        %v1141 = vsel %vm331, %v1129, 0
        %v1144 = vsel %vm331, %v1130, 0
        %1146 = vmatprep.subr.bf16.mxu0 %v1138
        %1147 = vmatpush1.bf16.msra.mxu0 %v1135
        %1148 = vmatprep.subr.bf16.mxu0 0
        %1149 = vmatpush1.bf16.msra.mxu0 0
        %1150 = vmatprep.subr.bf16.mxu0 0
        %1151 = vmatpush1.bf16.msra.mxu0 0
        %1152 = vmatprep.subr.bf16.mxu0 0
        %1153 = vmatpush1.bf16.msra.mxu0 0
        %1154 = vmatprep.subr.bf16.mxu0 0
        %1155 = vmatpush1.bf16.msra.mxu0 0
        %1156 = vmatprep.subr.bf16.mxu0 0
        %1157 = vmatpush1.bf16.msra.mxu0 0
        %1158 = vmatprep.subr.bf16.mxu0 0
        %1159 = vmatpush1.bf16.msra.mxu0 0
        %1160 = vmatprep.subr.bf16.mxu0 0
        %1161 = vmatpush1.bf16.msra.mxu0 0
        %1162 = vmatprep.subr.bf16.mxu0 0
        %1163 = vmatpush1.bf16.msra.mxu0 0
        %1164 = vmatprep.subr.bf16.mxu0 0
        %1165 = vmatpush1.bf16.msra.mxu0 0
        %1166 = vmatprep.subr.bf16.mxu0 0
        %1167 = vmatpush1.bf16.msra.mxu0 0
        %1168 = vmatprep.subr.bf16.mxu0 0
        %1169 = vmatpush1.bf16.msra.mxu0 0
        %1170 = vmatprep.subr.bf16.mxu0 0
        %1171 = vmatpush1.bf16.msra.mxu0 0
        %1172 = vmatprep.subr.bf16.mxu0 0
        %1173 = vmatpush1.bf16.msra.mxu0 0
        %1174 = vmatprep.subr.bf16.mxu0 0
        %1175 = vmatpush1.bf16.msra.mxu0 0
        %1176 = vmatprep.subr.bf16.mxu0 0
        %1177 = vmatpush1.bf16.msra.mxu0 0
        %1178 = vmatprep.mubr.bf16.mxu0 0
        %1179 = vmatmul.mubr.bf16.gmra.mrb[0].mxu0 %v1132
        %v1180 = vpop.f32.mrb[0].mxu0
        %v1181 = vadd.f32 0.0, %v1180
        %v1182 = vpop.f32.mrb[0].mxu0
        %v1183 = vadd.f32 0.0, %v1182
        %v1184 = vpop.f32.mrb[0].mxu0
        %v1185 = vpop.f32.mrb[0].mxu0
        %1186 = vdwg.mxu0
        %1187 = vmatprep.subr.bf16.mxu0 %v1144
        %1188 = vmatpush1.bf16.msra.mxu0 %v1141
        %1189 = vmatprep.subr.bf16.mxu0 0
        %1190 = vmatpush1.bf16.msra.mxu0 0
        %1191 = vmatprep.subr.bf16.mxu0 0
        %1192 = vmatpush1.bf16.msra.mxu0 0
        %1193 = vmatprep.subr.bf16.mxu0 0
        %1194 = vmatpush1.bf16.msra.mxu0 0
        %1195 = vmatprep.subr.bf16.mxu0 0
        %1196 = vmatpush1.bf16.msra.mxu0 0
        %1197 = vmatprep.subr.bf16.mxu0 0
        %1198 = vmatpush1.bf16.msra.mxu0 0
        %1199 = vmatprep.subr.bf16.mxu0 0
        %1200 = vmatpush1.bf16.msra.mxu0 0
        %1201 = vmatprep.subr.bf16.mxu0 0
        %1202 = vmatpush1.bf16.msra.mxu0 0
        %1203 = vmatprep.subr.bf16.mxu0 0
        %1204 = vmatpush1.bf16.msra.mxu0 0
        %1205 = vmatprep.subr.bf16.mxu0 0
        %1206 = vmatpush1.bf16.msra.mxu0 0
        %1207 = vmatprep.subr.bf16.mxu0 0
        %1208 = vmatpush1.bf16.msra.mxu0 0
        %1209 = vmatprep.subr.bf16.mxu0 0
        %1210 = vmatpush1.bf16.msra.mxu0 0
        %1211 = vmatprep.subr.bf16.mxu0 0
        %1212 = vmatpush1.bf16.msra.mxu0 0
        %1213 = vmatprep.subr.bf16.mxu0 0
        %1214 = vmatpush1.bf16.msra.mxu0 0
        %1215 = vmatprep.subr.bf16.mxu0 0
        %1216 = vmatpush1.bf16.msra.mxu0 0
        %1217 = vmatprep.subr.bf16.mxu0 0
        %1218 = vmatpush1.bf16.msra.mxu0 0
        %1219 = vmatprep.mubr.bf16.mxu0 0
        %1220 = vmatmul.mubr.bf16.gmra.mrb[0].mxu0 %v1132
        %v1221 = vpop.f32.mrb[0].mxu0
        %v1222 = vadd.f32 0.0, %v1221
        %v1223 = vpop.f32.mrb[0].mxu0
        %v1224 = vadd.f32 0.0, %v1223
        %v1225 = vpop.f32.mrb[0].mxu0
        %v1226 = vpop.f32.mrb[0].mxu0
        %1227 = vdwg.mxu0
        %v1228 = vadd.f32 %v1110, %v1181
        %v1229 = vadd.f32 %v1111, %v1183
        %v1230 = vadd.f32 %v1112, %v1222
        %v1231 = vadd.f32 %v1113, %v1224
        %1232 = vrot.lane.b32.xlu0 %v283, 96
        %v1233 = vpop.permute.xlu0 %1232
        %1234 = vrot.lane.b32.xlu0 %v303, 109
        %v1235 = vpop.permute.xlu0 %1234
        %1236 = vrot.lane.b32.xlu0 %v302, 109
        %v1237 = vpop.permute.xlu0 %1236
        %1238 = vrot.lane.b32.xlu0 %v304, 109
        %v1239 = vpop.permute.xlu0 %1238
        %1240 = vrot.lane.b32.xlu0 %v311, 109
        %v1241 = vpop.permute.xlu0 %1240
        %1242 = vrot.lane.b32.xlu0 %v879, 109
        %v1243 = vpop.permute.xlu0 %1242
        %vm1244 = vcmask 891904
        %v1245 = vsel %vm1244, %v1235, %v1237
        %v1246 = vsel %vm1244, %v1237, %v1239
        %v1247 = vsel %vm1244, %v1239, %v1241
        %v1248 = vsel %vm1244, %v1241, %v1243
        %v1250 = vsel %vm327, %v1233, 0
        %v1253 = vsel %vm331, %v1245, 0
        %v1256 = vsel %vm331, %v1246, 0
        %v1259 = vsel %vm331, %v1247, 0
        %v1262 = vsel %vm331, %v1248, 0
        %1264 = vmatprep.subr.bf16.mxu0 %v1256
        %1265 = vmatpush1.bf16.msra.mxu0 %v1253
        %1266 = vmatprep.subr.bf16.mxu0 0
        %1267 = vmatpush1.bf16.msra.mxu0 0
        %1268 = vmatprep.subr.bf16.mxu0 0
        %1269 = vmatpush1.bf16.msra.mxu0 0
        %1270 = vmatprep.subr.bf16.mxu0 0
        %1271 = vmatpush1.bf16.msra.mxu0 0
        %1272 = vmatprep.subr.bf16.mxu0 0
        %1273 = vmatpush1.bf16.msra.mxu0 0
        %1274 = vmatprep.subr.bf16.mxu0 0
        %1275 = vmatpush1.bf16.msra.mxu0 0
        %1276 = vmatprep.subr.bf16.mxu0 0
        %1277 = vmatpush1.bf16.msra.mxu0 0
        %1278 = vmatprep.subr.bf16.mxu0 0
        %1279 = vmatpush1.bf16.msra.mxu0 0
        %1280 = vmatprep.subr.bf16.mxu0 0
        %1281 = vmatpush1.bf16.msra.mxu0 0
        %1282 = vmatprep.subr.bf16.mxu0 0
        %1283 = vmatpush1.bf16.msra.mxu0 0
        %1284 = vmatprep.subr.bf16.mxu0 0
        %1285 = vmatpush1.bf16.msra.mxu0 0
        %1286 = vmatprep.subr.bf16.mxu0 0
        %1287 = vmatpush1.bf16.msra.mxu0 0
        %1288 = vmatprep.subr.bf16.mxu0 0
        %1289 = vmatpush1.bf16.msra.mxu0 0
        %1290 = vmatprep.subr.bf16.mxu0 0
        %1291 = vmatpush1.bf16.msra.mxu0 0
        %1292 = vmatprep.subr.bf16.mxu0 0
        %1293 = vmatpush1.bf16.msra.mxu0 0
        %1294 = vmatprep.subr.bf16.mxu0 0
        %1295 = vmatpush1.bf16.msra.mxu0 0
        %1296 = vmatprep.mubr.bf16.mxu0 0
        %1297 = vmatmul.mubr.bf16.gmra.mrb[0].mxu0 %v1250
        %v1298 = vpop.f32.mrb[0].mxu0
        %v1299 = vadd.f32 0.0, %v1298
        %v1300 = vpop.f32.mrb[0].mxu0
        %v1301 = vadd.f32 0.0, %v1300
        %v1302 = vpop.f32.mrb[0].mxu0
        %v1303 = vpop.f32.mrb[0].mxu0
        %1304 = vdwg.mxu0
        %1305 = vmatprep.subr.bf16.mxu0 %v1262
        %1306 = vmatpush1.bf16.msra.mxu0 %v1259
        %1307 = vmatprep.subr.bf16.mxu0 0
        %1308 = vmatpush1.bf16.msra.mxu0 0
        %1309 = vmatprep.subr.bf16.mxu0 0
        %1310 = vmatpush1.bf16.msra.mxu0 0
        %1311 = vmatprep.subr.bf16.mxu0 0
        %1312 = vmatpush1.bf16.msra.mxu0 0
        %1313 = vmatprep.subr.bf16.mxu0 0
        %1314 = vmatpush1.bf16.msra.mxu0 0
        %1315 = vmatprep.subr.bf16.mxu0 0
        %1316 = vmatpush1.bf16.msra.mxu0 0
        %1317 = vmatprep.subr.bf16.mxu0 0
        %1318 = vmatpush1.bf16.msra.mxu0 0
        %1319 = vmatprep.subr.bf16.mxu0 0
        %1320 = vmatpush1.bf16.msra.mxu0 0
        %1321 = vmatprep.subr.bf16.mxu0 0
        %1322 = vmatpush1.bf16.msra.mxu0 0
        %1323 = vmatprep.subr.bf16.mxu0 0
        %1324 = vmatpush1.bf16.msra.mxu0 0
        %1325 = vmatprep.subr.bf16.mxu0 0
        %1326 = vmatpush1.bf16.msra.mxu0 0
        %1327 = vmatprep.subr.bf16.mxu0 0
        %1328 = vmatpush1.bf16.msra.mxu0 0
        %1329 = vmatprep.subr.bf16.mxu0 0
        %1330 = vmatpush1.bf16.msra.mxu0 0
        %1331 = vmatprep.subr.bf16.mxu0 0
        %1332 = vmatpush1.bf16.msra.mxu0 0
        %1333 = vmatprep.subr.bf16.mxu0 0
        %1334 = vmatpush1.bf16.msra.mxu0 0
        %1335 = vmatprep.subr.bf16.mxu0 0
        %1336 = vmatpush1.bf16.msra.mxu0 0
        %1337 = vmatprep.mubr.bf16.mxu0 0
        %1338 = vmatmul.mubr.bf16.gmra.mrb[0].mxu0 %v1250
        %v1339 = vpop.f32.mrb[0].mxu0
        %v1340 = vadd.f32 0.0, %v1339
        %v1341 = vpop.f32.mrb[0].mxu0
        %v1342 = vadd.f32 0.0, %v1341
        %v1343 = vpop.f32.mrb[0].mxu0
        %v1344 = vpop.f32.mrb[0].mxu0
        %1345 = vdwg.mxu0
        %v1346 = vadd.f32 %v1228, %v1299
        %v1347 = vadd.f32 %v1229, %v1301
        %v1348 = vadd.f32 %v1230, %v1340
        %v1349 = vadd.f32 %v1231, %v1342
        %v1350 = vld [vmem:[%s3] sm:$0xff]
        %1352 = vset.pattern.permute.xlu0 0
        %1353 = vperm.xlu0 %1352, %v1350
        %v1354 = vpop.permute.xlu0 %1353
        %v1356 = vadd.f32 %v1346, %v1354
        %v1357 = vadd.f32 %v1347, %v1354
        %v1358 = vadd.f32 %v1348, %v1354
        %v1359 = vadd.f32 %v1349, %v1354
        %v1360 = vmul.f32 %v1356, 0.2
        %v1361 = vmul.f32 %v1357, 0.2
        %v1362 = vmul.f32 %v1358, 0.2
        %v1363 = vmul.f32 %v1359, 0.2
        %v1364 = vmax.f32 %v1356, %v1360
        %v1365 = vmax.f32 %v1357, %v1361
        %v1366 = vmax.f32 %v1358, %v1362
        %v1367 = vmax.f32 %v1359, %v1363
        %1368 = vst [vmem:[%s263] sm:$0xff] %v1364
        %1369 = vst [vmem:[%s263 + $0x8] sm:$0xff] %v1365
        %1370 = vst [vmem:[%s263 + $0x10] sm:$0xff] %v1366
        %1371 = vst [vmem:[%s263 + $0x18] sm:$0xff] %v1367
        %s1372 = sand.u32 %s130, 1
        %s1373 = scalar_lea.sflag [#allocation5], %s1372
        %s1374 = sand.u32 %s130, 1
        %s1375 = smul.addr %s1374, 32
        %s1376 = scalar_lea.vmem [#allocation8], %s1375
        // Predicated region
        $region45: #{tpu_custom_call.1} parent=35 // pred_check
          %p1377 = pneg %p140
        $region46: #{tpu_custom_call.1} parent=35 // pred_check_branch
          %1379 = sbr.rel (%p1377) target = $region48
        $region47: #{tpu_custom_call.1} parent=35 // pred_region
          %s1380 = smul.u32 4, %s24
          %s1382 = ssub.s32 512, 512
          %1383 = vsyncadd %s1373, %s1382
          %s1384 = smul.addr %s1380, 128
          %s1385 = scalar_lea.hbm %s4, %s1384
          %s1387 = sshll.u32 %s1376, 4
          %s1388 = int_to_ptr.vmem [resolvable:$true] %s1387
          %1390 = dma.vmem_to_hbm [thread:$0]  %s1388, 512, %s1385, %s1373
        $region48: #{tpu_custom_call.1} parent=35 // pred_fallthru
          _
      $region36: #{tpu_custom_call.1} parent=5 // pred_fallthru
        _
      %p1391 = scmp.le.s32.totalorder 2, %s19
      // Predicated region
      $region49: #{tpu_custom_call.1} parent=5 // pred_check
        %p1392 = pneg %p1391
      $region50: #{tpu_custom_call.1} parent=5 // pred_check_branch
        %1394 = sbr.rel (%p1392) target = $region52
      $region51: #{tpu_custom_call.1} parent=5 // pred_region
        %s1395 = ssub.s32 %s19, 2
        // Predicated region
        $region53: #{tpu_custom_call.1} parent=51 // pred_check
          %p1396 = pneg %p146
        $region54: #{tpu_custom_call.1} parent=51 // pred_check_branch
          %1398 = sbr.rel (%p1396) target = $region56
        $region55: #{tpu_custom_call.1} parent=51 // pred_region
          %s1399 = sand.u32 %s131, 1
          %s1400 = scalar_lea.sflag [#allocation5], %s1399
          %s1401 = sand.u32 %s131, 1
          %s1402 = smul.addr %s1401, 32
          %s1403 = scalar_lea.vmem [#allocation8], %s1402
          %1404 = dma.done %s1400, 512
        $region56: #{tpu_custom_call.1} parent=51 // pred_fallthru
          _
      $region52: #{tpu_custom_call.1} parent=5 // pred_fallthru
        _
    $region6: #{tpu_custom_call.1} parent=1 // loop_footer
      %s23 = sadd.s32 1, %s19
    $region7: #{tpu_custom_call.1} parent=1 // loop_footer_branch
      %18 = sbr.rel target = $region3
    $region8: #{tpu_custom_call.1} parent=1 // loop_exit
      _
    %1405 = vsyncpa [#allocation4], 1
    %s1406 = scalar_lea.sflag [#allocation4], 1
    %1407 = vsyncpa %s1406, 1
    %1408 = vsyncpa [#allocation7], 1
    %s1409 = scalar_lea.sflag [#allocation7], 1
    %1410 = vsyncpa %s1409, 1
    %1411 = vsyncpa [#allocation5], 1
    %s1412 = scalar_lea.sflag [#allocation5], 1
    %1413 = vsyncpa %s1412, 1

</llo_original>
